<compile_context>
chip_gen: v7x
topology: tpu7x:2x2x1
jax: 0.10.0
libtpu: 0.0.40
codegen_flags: <defaults>
</compile_context>

<pallas_src>
import math
import jax
import jax.numpy as jnp
from jax.experimental import pallas as pl
from jax.experimental.pallas import tpu as pltpu

# ----- small synthetic config (consistent with the GPTConfig fields used) -----
B, T, C = 2, 8, 32          # batch, seq, n_embd
N_HEAD = 4
D = C // N_HEAD             # head_dim = 8
D2 = D // 2                 # rotary half = 4
HD2 = N_HEAD * D2           # = C // 2 = 16
N_LAYER = 2
ATTN_SCALE = 1.0 / math.sqrt(2 * N_LAYER)
EPS = 1e-6

_QKT_DIMS = (((1,), (1,)), ((), ()))   # a @ b.T without an explicit transpose


def _rmsnorm(x):
    # matches torch rmsnorm: x * rsqrt(mean(x^2, -1) + eps)  (all float32 here)
    return x * jax.lax.rsqrt(jnp.mean(x * x, axis=-1, keepdims=True) + EPS)


def block_kernel(x_ref, cos_ref, sin_ref, w_qkv_ref, w_ap_ref,
                 w_fc_ref, w_mp_ref, o_ref, y_ref):
    x2 = x_ref[0]                    # (T, C) f32  -- this batch element
    cos = cos_ref[...]               # (T, H*D2) f32, head-tiled rotary table
    sin = sin_ref[...]

    # ---------------- attention branch ----------------
    xn = _rmsnorm(x2)
    qkv = jnp.dot(xn.astype(jnp.bfloat16), w_qkv_ref[...],
                  preferred_element_type=jnp.float32)        # (T, 3C) f32

    # qkv column layout (set up by the wrapper's weight-column permutation):
    #   [0, HD2)       q, first rotary halves (head-major)
    #   [HD2, C)       q, second rotary halves
    #   [C, C+HD2)     k, first halves
    #   [C+HD2, 2C)    k, second halves
    #   [2C, 3C)       v, original head-contiguous layout
    q1 = qkv[:, 0:HD2]
    q2 = qkv[:, HD2:C]
    k1 = qkv[:, C:C + HD2]
    k2 = qkv[:, C + HD2:2 * C]
    v = qkv[:, 2 * C:3 * C]

    # full-width rotary (apply_rotary_emb) in f32; cast to bf16 for the MXU
    q1r = (q1 * cos + q2 * sin).astype(jnp.bfloat16)
    q2r = (q2 * cos - q1 * sin).astype(jnp.bfloat16)
    k1r = (k1 * cos + k2 * sin).astype(jnp.bfloat16)
    k2r = (k2 * cos - k1 * sin).astype(jnp.bfloat16)
    vb = v.astype(jnp.bfloat16)

    # causal mask generated in-kernel (no HBM/VMEM mask buffer)
    row = jax.lax.broadcasted_iota(jnp.int32, (T, T), 0)
    col = jax.lax.broadcasted_iota(jnp.int32, (T, T), 1)
    neg = jnp.where(row >= col, 0.0, -1e30)                  # f32 additive mask

    scale = 1.0 / math.sqrt(D)
    for h in range(N_HEAD):
        sl = slice(h * D2, (h + 1) * D2)
        # rejoin the rotated halves -> one K=D contraction per head
        qh = jnp.concatenate([q1r[:, sl], q2r[:, sl]], axis=-1)   # (T, D) bf16
        kh = jnp.concatenate([k1r[:, sl], k2r[:, sl]], axis=-1)   # (T, D) bf16
        s = jax.lax.dot_general(qh, kh, _QKT_DIMS,
                                preferred_element_type=jnp.float32)
        s = s * scale + neg
        m = jnp.max(s, axis=-1, keepdims=True)
        p = jnp.exp(s - m)
        inv = pl.reciprocal(jnp.sum(p, axis=-1, keepdims=True), approx=True)
        p = (p * inv).astype(jnp.bfloat16)
        # write this head's output straight into the VMEM scratch slab
        y_ref[:, h * D:(h + 1) * D] = jnp.dot(
            p, vb[:, h * D:(h + 1) * D], preferred_element_type=jnp.float32)

    attn_out = jnp.dot(y_ref[...].astype(jnp.bfloat16), w_ap_ref[...],
                       preferred_element_type=jnp.float32)
    x1 = x2 + ATTN_SCALE * attn_out

    # ---------------- MLP branch ----------------
    xn2 = _rmsnorm(x1)
    hdn = jnp.dot(xn2.astype(jnp.bfloat16), w_fc_ref[...],
                  preferred_element_type=jnp.float32)        # (T, 4C) f32
    # exact erf GELU (matches torch F.gelu default), kept in f32
    hdn = 0.5 * hdn * (1.0 + jax.lax.erf(hdn * (1.0 / math.sqrt(2.0))))
    mlp_out = jnp.dot(hdn.astype(jnp.bfloat16), w_mp_ref[...],
                      preferred_element_type=jnp.float32)

    o_ref[0] = x1 + mlp_out


def _qkv_column_perm():
    # Reorder the q/k columns of c_attn so all heads' first rotary halves are
    # contiguous, then all second halves; v keeps its head-contiguous layout.
    first = [h * D + j for h in range(N_HEAD) for j in range(D2)]
    second = [h * D + D2 + j for h in range(N_HEAD) for j in range(D2)]
    q_perm = first + second
    k_perm = [C + i for i in q_perm]
    v_perm = list(range(2 * C, 3 * C))
    return jnp.asarray(q_perm + k_perm + v_perm, dtype=jnp.int32)


def block_forward(x, cos, sin, w_attn, w_ap, w_fc, w_mp):
    # bf16 weights (MXU operands); f32 accumulation inside the kernel.
    w_qkv = w_attn[:, _qkv_column_perm()].astype(jnp.bfloat16)   # (C, 3C)
    w_ap_b = w_ap.astype(jnp.bfloat16)
    w_fc_b = w_fc.astype(jnp.bfloat16)
    w_mp_b = w_mp.astype(jnp.bfloat16)

    # rotary table tiled across heads only (NOT across batch): (T, H*D2)
    cos_t = jnp.tile(cos, (1, N_HEAD)).astype(jnp.float32)
    sin_t = jnp.tile(sin, (1, N_HEAD)).astype(jnp.float32)

    const = lambda b: (0, 0)   # weights / rotary tables: resident across steps

    grid_spec = pltpu.PrefetchScalarGridSpec(
        num_scalar_prefetch=0,
        grid=(B,),
        in_specs=[
            pl.BlockSpec((1, T, C), lambda b: (b, 0, 0)),      # x (per batch)
            pl.BlockSpec((T, HD2), const),                     # cos
            pl.BlockSpec((T, HD2), const),                     # sin
            pl.BlockSpec((C, 3 * C), const),                   # c_attn
            pl.BlockSpec((C, C), const),                       # attn c_proj
            pl.BlockSpec((C, 4 * C), const),                   # mlp c_fc
            pl.BlockSpec((4 * C, C), const),                   # mlp c_proj
        ],
        out_specs=pl.BlockSpec((1, T, C), lambda b: (b, 0, 0)),
        scratch_shapes=[pltpu.VMEM((T, C), jnp.float32)],      # head outputs
    )

    out = pl.pallas_call(
        block_kernel,
        out_shape=jax.ShapeDtypeStruct((B, T, C), jnp.float32),
        grid_spec=grid_spec,
        compiler_params=pltpu.CompilerParams(
            dimension_semantics=("parallel",),      # shards batch across TCs on v7x
            vmem_limit_bytes=32 * 1024 * 1024),
    )(x, cos_t, sin_t, w_qkv, w_ap_b, w_fc_b, w_mp_b)
    return out


# ---------- pure-JAX reference (f32, exact module semantics) ----------
def ref_block(x, cos, sin, w_attn, w_ap, w_fc, w_mp):
    def rms(v):
        return v * jax.lax.rsqrt(jnp.mean(v * v, -1, keepdims=True) + EPS)

    xn = rms(x)
    qkv = xn @ w_attn
    q, k, v = jnp.split(qkv, 3, axis=-1)
    q = q.reshape(B, T, N_HEAD, D)
    k = k.reshape(B, T, N_HEAD, D)
    v = v.reshape(B, T, N_HEAD, D)

    def rot(u):
        u1, u2 = u[..., :D2], u[..., D2:]
        c = cos[None, :, None, :]
        s = sin[None, :, None, :]
        return jnp.concatenate([u1 * c + u2 * s, -u1 * s + u2 * c], -1)

    q, k = rot(q), rot(k)
    s = jnp.einsum('bthd,bshd->bhts', q, k) / math.sqrt(D)
    mask = jnp.tril(jnp.ones((T, T), bool))
    s = jnp.where(mask[None, None], s, -jnp.inf)
    p = jax.nn.softmax(s, axis=-1)
    y = jnp.einsum('bhts,bshd->bthd', p, v).reshape(B, T, C)
    x1 = x + ATTN_SCALE * (y @ w_ap)

    xn2 = rms(x1)
    h = xn2 @ w_fc
    h = 0.5 * h * (1.0 + jax.lax.erf(h / math.sqrt(2.0)))
    return x1 + h @ w_mp


if __name__ == "__main__":
    key = jax.random.PRNGKey(0)
    kx, k1, k2, k3, k4 = jax.random.split(key, 5)

    x = jax.random.normal(kx, (B, T, C), jnp.float32)

    # nn.Linear(bias=False) weights, stored pre-transposed as (in, out) so the
    # kernel computes x @ W directly. Deterministic uniform init ~ 1/sqrt(fan_in).
    def lin(k, fan_in, fan_out):
        bound = 1.0 / math.sqrt(fan_in)
        return jax.random.uniform(k, (fan_in, fan_out), jnp.float32, -bound, bound)

    w_attn = lin(k1, C, 3 * C)     # c_attn
    w_ap = lin(k2, C, C)           # attn c_proj
    w_fc = lin(k3, C, 4 * C)       # mlp c_fc
    w_mp = lin(k4, 4 * C, C)       # mlp c_proj

    # rotary cos/sin tables (Rotary module), computed once in plain JAX (glue)
    inv_freq = 1.0 / (10000.0 ** (jnp.arange(0, D, 2, dtype=jnp.float32) / D))
    t = jnp.arange(T, dtype=jnp.float32)
    freqs = jnp.outer(t, inv_freq)           # (T, D2)
    cos, sin = jnp.cos(freqs), jnp.sin(freqs)

    out = block_forward(x, cos, sin, w_attn, w_ap, w_fc, w_mp)
    out = jax.block_until_ready(out)

    ref = ref_block(x, cos, sin, w_attn, w_ap, w_fc, w_mp)
    # Loosened tolerance: bf16 MXU operands (~0.4% rel per matmul) + approx
    # (EUP) reciprocal in the softmax; f32 reference keeps module semantics.
    assert jnp.allclose(out, ref, atol=5e-2, rtol=5e-2), "mismatch vs reference"

    print("KERNEL_OK")
</pallas_src>

<mosaic_0001>
module attributes {stable_mosaic.version = 11 : i64} {
  func.func @block_kernel(%arg0: i32, %arg1: memref<1x8x32xf32, #tpu.memory_space<vmem>>, %arg2: memref<8x16xf32, #tpu.memory_space<vmem>>, %arg3: memref<8x16xf32, #tpu.memory_space<vmem>>, %arg4: memref<32x96xbf16, #tpu.memory_space<vmem>>, %arg5: memref<32x32xbf16, #tpu.memory_space<vmem>>, %arg6: memref<32x128xbf16, #tpu.memory_space<vmem>>, %arg7: memref<128x32xbf16, #tpu.memory_space<vmem>>, %arg8: memref<1x8x32xf32, #tpu.memory_space<vmem>>, %arg9: memref<8x32xf32, #tpu.memory_space<vmem>>) attributes {dimension_semantics = [#tpu.dimension_semantics<parallel>], iteration_bounds = array<i64: 2>, scalar_prefetch = 0 : i64, scratch_operands = 1 : i64, tpu.core_type = #tpu.core_type<tc>, window_params = [{transform_indices = @transform_0, window_bounds = array<i64: 1, 8, 32>}, {pipeline_mode = #tpu.pipeline_mode<synchronous>, transform_indices = @transform_1, window_bounds = array<i64: 8, 16>}, {pipeline_mode = #tpu.pipeline_mode<synchronous>, transform_indices = @transform_2, window_bounds = array<i64: 8, 16>}, {pipeline_mode = #tpu.pipeline_mode<synchronous>, transform_indices = @transform_3, window_bounds = array<i64: 32, 96>}, {pipeline_mode = #tpu.pipeline_mode<synchronous>, transform_indices = @transform_4, window_bounds = array<i64: 32, 32>}, {pipeline_mode = #tpu.pipeline_mode<synchronous>, transform_indices = @transform_5, window_bounds = array<i64: 32, 128>}, {pipeline_mode = #tpu.pipeline_mode<synchronous>, transform_indices = @transform_6, window_bounds = array<i64: 128, 32>}, {transform_indices = @transform_7, window_bounds = array<i64: 1, 8, 32>}]} {
    %c0 = arith.constant 0 : index
    %c0_0 = arith.constant 0 : index
    %c0_1 = arith.constant 0 : index
    %0 = vector.load %arg1[%c0, %c0_0, %c0_1] : memref<1x8x32xf32, #tpu.memory_space<vmem>>, vector<1x8x32xf32>
    %1 = vector.shape_cast %0 : vector<1x8x32xf32> to vector<8x32xf32>
    %c0_2 = arith.constant 0 : index
    %c0_3 = arith.constant 0 : index
    %2 = vector.load %arg2[%c0_2, %c0_3] : memref<8x16xf32, #tpu.memory_space<vmem>>, vector<8x16xf32>
    %c0_4 = arith.constant 0 : index
    %c0_5 = arith.constant 0 : index
    %3 = vector.load %arg3[%c0_4, %c0_5] : memref<8x16xf32, #tpu.memory_space<vmem>>, vector<8x16xf32>
    %4 = arith.mulf %1, %1 : vector<8x32xf32>
    %cst = arith.constant dense<0.000000e+00> : vector<8xf32>
    %5 = vector.multi_reduction <add>, %4, %cst [1] : vector<8x32xf32> to vector<8xf32>
    %6 = vector.shape_cast %5 : vector<8xf32> to vector<8x1xf32>
    %cst_6 = arith.constant 3.200000e+01 : f32
    %7 = vector.broadcast %cst_6 : f32 to vector<8x1xf32>
    %8 = arith.divf %6, %7 : vector<8x1xf32>
    %cst_7 = arith.constant 9.99999997E-7 : f32
    %9 = vector.broadcast %cst_7 : f32 to vector<8x1xf32>
    %10 = arith.addf %8, %9 : vector<8x1xf32>
    %11 = math.rsqrt %10 : vector<8x1xf32>
    %12 = vector.broadcast %11 : vector<8x1xf32> to vector<8x32xf32>
    %13 = arith.mulf %1, %12 : vector<8x32xf32>
    %14 = arith.truncf %13 : vector<8x32xf32> to vector<8x32xbf16>
    %c0_8 = arith.constant 0 : index
    %c0_9 = arith.constant 0 : index
    %15 = vector.load %arg4[%c0_8, %c0_9] : memref<32x96xbf16, #tpu.memory_space<vmem>>, vector<32x96xbf16>
    %cst_10 = arith.constant dense<0.000000e+00> : vector<8x96xf32>
    %16 = tpu.matmul %14, %15, %cst_10 {dimension_numbers = #tpu.dot_dimension_numbers<[1], [0], [0], [1], [0, 0, 1, 1], [], []>} : vector<8x32xbf16>, vector<32x96xbf16>, vector<8x96xf32> -> vector<8x96xf32>
    %17 = vector.extract_strided_slice %16 {offsets = [0, 0], sizes = [8, 16], strides = [1, 1]} : vector<8x96xf32> to vector<8x16xf32>
    %18 = vector.extract_strided_slice %16 {offsets = [0, 16], sizes = [8, 16], strides = [1, 1]} : vector<8x96xf32> to vector<8x16xf32>
    %19 = vector.extract_strided_slice %16 {offsets = [0, 32], sizes = [8, 16], strides = [1, 1]} : vector<8x96xf32> to vector<8x16xf32>
    %20 = vector.extract_strided_slice %16 {offsets = [0, 48], sizes = [8, 16], strides = [1, 1]} : vector<8x96xf32> to vector<8x16xf32>
    %21 = vector.extract_strided_slice %16 {offsets = [0, 64], sizes = [8, 32], strides = [1, 1]} : vector<8x96xf32> to vector<8x32xf32>
    %22 = arith.mulf %17, %2 : vector<8x16xf32>
    %23 = arith.mulf %18, %3 : vector<8x16xf32>
    %24 = arith.addf %22, %23 : vector<8x16xf32>
    %25 = arith.truncf %24 : vector<8x16xf32> to vector<8x16xbf16>
    %26 = arith.mulf %18, %2 : vector<8x16xf32>
    %27 = arith.mulf %17, %3 : vector<8x16xf32>
    %28 = arith.subf %26, %27 : vector<8x16xf32>
    %29 = arith.truncf %28 : vector<8x16xf32> to vector<8x16xbf16>
    %30 = arith.mulf %19, %2 : vector<8x16xf32>
    %31 = arith.mulf %20, %3 : vector<8x16xf32>
    %32 = arith.addf %30, %31 : vector<8x16xf32>
    %33 = arith.truncf %32 : vector<8x16xf32> to vector<8x16xbf16>
    %34 = arith.mulf %20, %2 : vector<8x16xf32>
    %35 = arith.mulf %19, %3 : vector<8x16xf32>
    %36 = arith.subf %34, %35 : vector<8x16xf32>
    %37 = arith.truncf %36 : vector<8x16xf32> to vector<8x16xbf16>
    %38 = arith.truncf %21 : vector<8x32xf32> to vector<8x32xbf16>
    %39 = tpu.iota {dimensions = array<i32: 0>} : vector<8x8xi32>
    %40 = tpu.iota {dimensions = array<i32: 1>} : vector<8x8xi32>
    %41 = arith.cmpi sge, %39, %40 : vector<8x8xi32>
    %cst_11 = arith.constant 0.000000e+00 : f32
    %cst_12 = arith.constant -1.000000e+30 : f32
    %42 = vector.broadcast %cst_11 : f32 to vector<8x8xf32>
    %43 = vector.broadcast %cst_12 : f32 to vector<8x8xf32>
    %44 = arith.select %41, %42, %43 : vector<8x8xi1>, vector<8x8xf32>
    %45 = vector.extract_strided_slice %25 {offsets = [0, 0], sizes = [8, 4], strides = [1, 1]} : vector<8x16xbf16> to vector<8x4xbf16>
    %46 = vector.extract_strided_slice %29 {offsets = [0, 0], sizes = [8, 4], strides = [1, 1]} : vector<8x16xbf16> to vector<8x4xbf16>
    %47 = tpu.concatenate %45, %46 in 1 : vector<8x4xbf16>, vector<8x4xbf16> -> vector<8x8xbf16>
    %48 = vector.extract_strided_slice %33 {offsets = [0, 0], sizes = [8, 4], strides = [1, 1]} : vector<8x16xbf16> to vector<8x4xbf16>
    %49 = vector.extract_strided_slice %37 {offsets = [0, 0], sizes = [8, 4], strides = [1, 1]} : vector<8x16xbf16> to vector<8x4xbf16>
    %50 = tpu.concatenate %48, %49 in 1 : vector<8x4xbf16>, vector<8x4xbf16> -> vector<8x8xbf16>
    %cst_13 = arith.constant dense<0.000000e+00> : vector<8x8xf32>
    %51 = tpu.matmul %47, %50, %cst_13 {dimension_numbers = #tpu.dot_dimension_numbers<[1], [1], [0], [0], [0, 0, 1, 0], [], []>} : vector<8x8xbf16>, vector<8x8xbf16>, vector<8x8xf32> -> vector<8x8xf32>
    %cst_14 = arith.constant 0.353553385 : f32
    %52 = vector.broadcast %cst_14 : f32 to vector<8x8xf32>
    %53 = arith.mulf %51, %52 : vector<8x8xf32>
    %54 = arith.addf %53, %44 : vector<8x8xf32>
    %cst_15 = arith.constant dense<0xFF800000> : vector<8xf32>
    %55 = vector.multi_reduction <maximumf>, %54, %cst_15 [1] : vector<8x8xf32> to vector<8xf32>
    %56 = vector.shape_cast %55 : vector<8xf32> to vector<8x1xf32>
    %57 = vector.broadcast %56 : vector<8x1xf32> to vector<8x8xf32>
    %58 = arith.subf %54, %57 : vector<8x8xf32>
    %59 = math.exp %58 : vector<8x8xf32>
    %cst_16 = arith.constant dense<0.000000e+00> : vector<8xf32>
    %60 = vector.multi_reduction <add>, %59, %cst_16 [1] : vector<8x8xf32> to vector<8xf32>
    %61 = vector.shape_cast %60 : vector<8xf32> to vector<8x1xf32>
    %62 = tpu.reciprocal %61 {approx = true} : vector<8x1xf32> -> vector<8x1xf32>
    %63 = vector.broadcast %62 : vector<8x1xf32> to vector<8x8xf32>
    %64 = arith.mulf %59, %63 : vector<8x8xf32>
    %65 = arith.truncf %64 : vector<8x8xf32> to vector<8x8xbf16>
    %66 = vector.extract_strided_slice %38 {offsets = [0, 0], sizes = [8, 8], strides = [1, 1]} : vector<8x32xbf16> to vector<8x8xbf16>
    %cst_17 = arith.constant dense<0.000000e+00> : vector<8x8xf32>
    %67 = tpu.matmul %65, %66, %cst_17 {dimension_numbers = #tpu.dot_dimension_numbers<[1], [0], [0], [1], [0, 0, 1, 1], [], []>} : vector<8x8xbf16>, vector<8x8xbf16>, vector<8x8xf32> -> vector<8x8xf32>
    %c0_18 = arith.constant 0 : index
    %c0_19 = arith.constant 0 : index
    %68 = vector.load %arg9[%c0_18, %c0_19] : memref<8x32xf32, #tpu.memory_space<vmem>>, vector<8x8xf32>
    tpu.vector_store %arg9[%c0_18, %c0_19], %67 {strides = array<i32>} : memref<8x32xf32, #tpu.memory_space<vmem>>, vector<8x8xf32>,
    %69 = vector.extract_strided_slice %25 {offsets = [0, 4], sizes = [8, 4], strides = [1, 1]} : vector<8x16xbf16> to vector<8x4xbf16>
    %70 = vector.extract_strided_slice %29 {offsets = [0, 4], sizes = [8, 4], strides = [1, 1]} : vector<8x16xbf16> to vector<8x4xbf16>
    %71 = tpu.concatenate %69, %70 in 1 : vector<8x4xbf16>, vector<8x4xbf16> -> vector<8x8xbf16>
    %72 = vector.extract_strided_slice %33 {offsets = [0, 4], sizes = [8, 4], strides = [1, 1]} : vector<8x16xbf16> to vector<8x4xbf16>
    %73 = vector.extract_strided_slice %37 {offsets = [0, 4], sizes = [8, 4], strides = [1, 1]} : vector<8x16xbf16> to vector<8x4xbf16>
    %74 = tpu.concatenate %72, %73 in 1 : vector<8x4xbf16>, vector<8x4xbf16> -> vector<8x8xbf16>
    %cst_20 = arith.constant dense<0.000000e+00> : vector<8x8xf32>
    %75 = tpu.matmul %71, %74, %cst_20 {dimension_numbers = #tpu.dot_dimension_numbers<[1], [1], [0], [0], [0, 0, 1, 0], [], []>} : vector<8x8xbf16>, vector<8x8xbf16>, vector<8x8xf32> -> vector<8x8xf32>
    %cst_21 = arith.constant 0.353553385 : f32
    %76 = vector.broadcast %cst_21 : f32 to vector<8x8xf32>
    %77 = arith.mulf %75, %76 : vector<8x8xf32>
    %78 = arith.addf %77, %44 : vector<8x8xf32>
    %cst_22 = arith.constant dense<0xFF800000> : vector<8xf32>
    %79 = vector.multi_reduction <maximumf>, %78, %cst_22 [1] : vector<8x8xf32> to vector<8xf32>
    %80 = vector.shape_cast %79 : vector<8xf32> to vector<8x1xf32>
    %81 = vector.broadcast %80 : vector<8x1xf32> to vector<8x8xf32>
    %82 = arith.subf %78, %81 : vector<8x8xf32>
    %83 = math.exp %82 : vector<8x8xf32>
    %cst_23 = arith.constant dense<0.000000e+00> : vector<8xf32>
    %84 = vector.multi_reduction <add>, %83, %cst_23 [1] : vector<8x8xf32> to vector<8xf32>
    %85 = vector.shape_cast %84 : vector<8xf32> to vector<8x1xf32>
    %86 = tpu.reciprocal %85 {approx = true} : vector<8x1xf32> -> vector<8x1xf32>
    %87 = vector.broadcast %86 : vector<8x1xf32> to vector<8x8xf32>
    %88 = arith.mulf %83, %87 : vector<8x8xf32>
    %89 = arith.truncf %88 : vector<8x8xf32> to vector<8x8xbf16>
    %90 = vector.extract_strided_slice %38 {offsets = [0, 8], sizes = [8, 8], strides = [1, 1]} : vector<8x32xbf16> to vector<8x8xbf16>
    %cst_24 = arith.constant dense<0.000000e+00> : vector<8x8xf32>
    %91 = tpu.matmul %89, %90, %cst_24 {dimension_numbers = #tpu.dot_dimension_numbers<[1], [0], [0], [1], [0, 0, 1, 1], [], []>} : vector<8x8xbf16>, vector<8x8xbf16>, vector<8x8xf32> -> vector<8x8xf32>
    %c0_25 = arith.constant 0 : index
    %c8 = arith.constant 8 : index
    %92 = vector.load %arg9[%c0_25, %c8] : memref<8x32xf32, #tpu.memory_space<vmem>>, vector<8x8xf32>
    tpu.vector_store %arg9[%c0_25, %c8], %91 {strides = array<i32>} : memref<8x32xf32, #tpu.memory_space<vmem>>, vector<8x8xf32>,
    %93 = vector.extract_strided_slice %25 {offsets = [0, 8], sizes = [8, 4], strides = [1, 1]} : vector<8x16xbf16> to vector<8x4xbf16>
    %94 = vector.extract_strided_slice %29 {offsets = [0, 8], sizes = [8, 4], strides = [1, 1]} : vector<8x16xbf16> to vector<8x4xbf16>
    %95 = tpu.concatenate %93, %94 in 1 : vector<8x4xbf16>, vector<8x4xbf16> -> vector<8x8xbf16>
    %96 = vector.extract_strided_slice %33 {offsets = [0, 8], sizes = [8, 4], strides = [1, 1]} : vector<8x16xbf16> to vector<8x4xbf16>
    %97 = vector.extract_strided_slice %37 {offsets = [0, 8], sizes = [8, 4], strides = [1, 1]} : vector<8x16xbf16> to vector<8x4xbf16>
    %98 = tpu.concatenate %96, %97 in 1 : vector<8x4xbf16>, vector<8x4xbf16> -> vector<8x8xbf16>
    %cst_26 = arith.constant dense<0.000000e+00> : vector<8x8xf32>
    %99 = tpu.matmul %95, %98, %cst_26 {dimension_numbers = #tpu.dot_dimension_numbers<[1], [1], [0], [0], [0, 0, 1, 0], [], []>} : vector<8x8xbf16>, vector<8x8xbf16>, vector<8x8xf32> -> vector<8x8xf32>
    %cst_27 = arith.constant 0.353553385 : f32
    %100 = vector.broadcast %cst_27 : f32 to vector<8x8xf32>
    %101 = arith.mulf %99, %100 : vector<8x8xf32>
    %102 = arith.addf %101, %44 : vector<8x8xf32>
    %cst_28 = arith.constant dense<0xFF800000> : vector<8xf32>
    %103 = vector.multi_reduction <maximumf>, %102, %cst_28 [1] : vector<8x8xf32> to vector<8xf32>
    %104 = vector.shape_cast %103 : vector<8xf32> to vector<8x1xf32>
    %105 = vector.broadcast %104 : vector<8x1xf32> to vector<8x8xf32>
    %106 = arith.subf %102, %105 : vector<8x8xf32>
    %107 = math.exp %106 : vector<8x8xf32>
    %cst_29 = arith.constant dense<0.000000e+00> : vector<8xf32>
    %108 = vector.multi_reduction <add>, %107, %cst_29 [1] : vector<8x8xf32> to vector<8xf32>
    %109 = vector.shape_cast %108 : vector<8xf32> to vector<8x1xf32>
    %110 = tpu.reciprocal %109 {approx = true} : vector<8x1xf32> -> vector<8x1xf32>
    %111 = vector.broadcast %110 : vector<8x1xf32> to vector<8x8xf32>
    %112 = arith.mulf %107, %111 : vector<8x8xf32>
    %113 = arith.truncf %112 : vector<8x8xf32> to vector<8x8xbf16>
    %114 = vector.extract_strided_slice %38 {offsets = [0, 16], sizes = [8, 8], strides = [1, 1]} : vector<8x32xbf16> to vector<8x8xbf16>
    %cst_30 = arith.constant dense<0.000000e+00> : vector<8x8xf32>
    %115 = tpu.matmul %113, %114, %cst_30 {dimension_numbers = #tpu.dot_dimension_numbers<[1], [0], [0], [1], [0, 0, 1, 1], [], []>} : vector<8x8xbf16>, vector<8x8xbf16>, vector<8x8xf32> -> vector<8x8xf32>
    %c0_31 = arith.constant 0 : index
    %c16 = arith.constant 16 : index
    %116 = vector.load %arg9[%c0_31, %c16] : memref<8x32xf32, #tpu.memory_space<vmem>>, vector<8x8xf32>
    tpu.vector_store %arg9[%c0_31, %c16], %115 {strides = array<i32>} : memref<8x32xf32, #tpu.memory_space<vmem>>, vector<8x8xf32>,
    %117 = vector.extract_strided_slice %25 {offsets = [0, 12], sizes = [8, 4], strides = [1, 1]} : vector<8x16xbf16> to vector<8x4xbf16>
    %118 = vector.extract_strided_slice %29 {offsets = [0, 12], sizes = [8, 4], strides = [1, 1]} : vector<8x16xbf16> to vector<8x4xbf16>
    %119 = tpu.concatenate %117, %118 in 1 : vector<8x4xbf16>, vector<8x4xbf16> -> vector<8x8xbf16>
    %120 = vector.extract_strided_slice %33 {offsets = [0, 12], sizes = [8, 4], strides = [1, 1]} : vector<8x16xbf16> to vector<8x4xbf16>
    %121 = vector.extract_strided_slice %37 {offsets = [0, 12], sizes = [8, 4], strides = [1, 1]} : vector<8x16xbf16> to vector<8x4xbf16>
    %122 = tpu.concatenate %120, %121 in 1 : vector<8x4xbf16>, vector<8x4xbf16> -> vector<8x8xbf16>
    %cst_32 = arith.constant dense<0.000000e+00> : vector<8x8xf32>
    %123 = tpu.matmul %119, %122, %cst_32 {dimension_numbers = #tpu.dot_dimension_numbers<[1], [1], [0], [0], [0, 0, 1, 0], [], []>} : vector<8x8xbf16>, vector<8x8xbf16>, vector<8x8xf32> -> vector<8x8xf32>
    %cst_33 = arith.constant 0.353553385 : f32
    %124 = vector.broadcast %cst_33 : f32 to vector<8x8xf32>
    %125 = arith.mulf %123, %124 : vector<8x8xf32>
    %126 = arith.addf %125, %44 : vector<8x8xf32>
    %cst_34 = arith.constant dense<0xFF800000> : vector<8xf32>
    %127 = vector.multi_reduction <maximumf>, %126, %cst_34 [1] : vector<8x8xf32> to vector<8xf32>
    %128 = vector.shape_cast %127 : vector<8xf32> to vector<8x1xf32>
    %129 = vector.broadcast %128 : vector<8x1xf32> to vector<8x8xf32>
    %130 = arith.subf %126, %129 : vector<8x8xf32>
    %131 = math.exp %130 : vector<8x8xf32>
    %cst_35 = arith.constant dense<0.000000e+00> : vector<8xf32>
    %132 = vector.multi_reduction <add>, %131, %cst_35 [1] : vector<8x8xf32> to vector<8xf32>
    %133 = vector.shape_cast %132 : vector<8xf32> to vector<8x1xf32>
    %134 = tpu.reciprocal %133 {approx = true} : vector<8x1xf32> -> vector<8x1xf32>
    %135 = vector.broadcast %134 : vector<8x1xf32> to vector<8x8xf32>
    %136 = arith.mulf %131, %135 : vector<8x8xf32>
    %137 = arith.truncf %136 : vector<8x8xf32> to vector<8x8xbf16>
    %138 = vector.extract_strided_slice %38 {offsets = [0, 24], sizes = [8, 8], strides = [1, 1]} : vector<8x32xbf16> to vector<8x8xbf16>
    %cst_36 = arith.constant dense<0.000000e+00> : vector<8x8xf32>
    %139 = tpu.matmul %137, %138, %cst_36 {dimension_numbers = #tpu.dot_dimension_numbers<[1], [0], [0], [1], [0, 0, 1, 1], [], []>} : vector<8x8xbf16>, vector<8x8xbf16>, vector<8x8xf32> -> vector<8x8xf32>
    %c0_37 = arith.constant 0 : index
    %c24 = arith.constant 24 : index
    %140 = vector.load %arg9[%c0_37, %c24] : memref<8x32xf32, #tpu.memory_space<vmem>>, vector<8x8xf32>
    tpu.vector_store %arg9[%c0_37, %c24], %139 {strides = array<i32>} : memref<8x32xf32, #tpu.memory_space<vmem>>, vector<8x8xf32>,
    %c0_38 = arith.constant 0 : index
    %c0_39 = arith.constant 0 : index
    %141 = vector.load %arg9[%c0_38, %c0_39] : memref<8x32xf32, #tpu.memory_space<vmem>>, vector<8x32xf32>
    %142 = arith.truncf %141 : vector<8x32xf32> to vector<8x32xbf16>
    %c0_40 = arith.constant 0 : index
    %c0_41 = arith.constant 0 : index
    %143 = vector.load %arg5[%c0_40, %c0_41] : memref<32x32xbf16, #tpu.memory_space<vmem>>, vector<32x32xbf16>
    %cst_42 = arith.constant dense<0.000000e+00> : vector<8x32xf32>
    %144 = tpu.matmul %142, %143, %cst_42 {dimension_numbers = #tpu.dot_dimension_numbers<[1], [0], [0], [1], [0, 0, 1, 1], [], []>} : vector<8x32xbf16>, vector<32x32xbf16>, vector<8x32xf32> -> vector<8x32xf32>
    %cst_43 = arith.constant 5.000000e-01 : f32
    %145 = vector.broadcast %cst_43 : f32 to vector<8x32xf32>
    %146 = arith.mulf %145, %144 : vector<8x32xf32>
    %147 = arith.addf %1, %146 : vector<8x32xf32>
    %148 = arith.mulf %147, %147 : vector<8x32xf32>
    %cst_44 = arith.constant dense<0.000000e+00> : vector<8xf32>
    %149 = vector.multi_reduction <add>, %148, %cst_44 [1] : vector<8x32xf32> to vector<8xf32>
    %150 = vector.shape_cast %149 : vector<8xf32> to vector<8x1xf32>
    %cst_45 = arith.constant 3.200000e+01 : f32
    %151 = vector.broadcast %cst_45 : f32 to vector<8x1xf32>
    %152 = arith.divf %150, %151 : vector<8x1xf32>
    %cst_46 = arith.constant 9.99999997E-7 : f32
    %153 = vector.broadcast %cst_46 : f32 to vector<8x1xf32>
    %154 = arith.addf %152, %153 : vector<8x1xf32>
    %155 = math.rsqrt %154 : vector<8x1xf32>
    %156 = vector.broadcast %155 : vector<8x1xf32> to vector<8x32xf32>
    %157 = arith.mulf %147, %156 : vector<8x32xf32>
    %158 = arith.truncf %157 : vector<8x32xf32> to vector<8x32xbf16>
    %c0_47 = arith.constant 0 : index
    %c0_48 = arith.constant 0 : index
    %159 = vector.load %arg6[%c0_47, %c0_48] : memref<32x128xbf16, #tpu.memory_space<vmem>>, vector<32x128xbf16>
    %cst_49 = arith.constant dense<0.000000e+00> : vector<8x128xf32>
    %160 = tpu.matmul %158, %159, %cst_49 {dimension_numbers = #tpu.dot_dimension_numbers<[1], [0], [0], [1], [0, 0, 1, 1], [], []>} : vector<8x32xbf16>, vector<32x128xbf16>, vector<8x128xf32> -> vector<8x128xf32>
    %cst_50 = arith.constant 5.000000e-01 : f32
    %161 = vector.broadcast %cst_50 : f32 to vector<8x128xf32>
    %162 = arith.mulf %161, %160 : vector<8x128xf32>
    %cst_51 = arith.constant 0.707106769 : f32
    %163 = vector.broadcast %cst_51 : f32 to vector<8x128xf32>
    %164 = arith.mulf %160, %163 : vector<8x128xf32>
    %165 = math.erf %164 : vector<8x128xf32>
    %cst_52 = arith.constant 1.000000e+00 : f32
    %166 = vector.broadcast %cst_52 : f32 to vector<8x128xf32>
    %167 = arith.addf %166, %165 : vector<8x128xf32>
    %168 = arith.mulf %162, %167 : vector<8x128xf32>
    %169 = arith.truncf %168 : vector<8x128xf32> to vector<8x128xbf16>
    %c0_53 = arith.constant 0 : index
    %c0_54 = arith.constant 0 : index
    %170 = vector.load %arg7[%c0_53, %c0_54] : memref<128x32xbf16, #tpu.memory_space<vmem>>, vector<128x32xbf16>
    %cst_55 = arith.constant dense<0.000000e+00> : vector<8x32xf32>
    %171 = tpu.matmul %169, %170, %cst_55 {dimension_numbers = #tpu.dot_dimension_numbers<[1], [0], [0], [1], [0, 0, 1, 1], [], []>} : vector<8x128xbf16>, vector<128x32xbf16>, vector<8x32xf32> -> vector<8x32xf32>
    %172 = arith.addf %147, %171 : vector<8x32xf32>
    %c0_56 = arith.constant 0 : index
    %c0_57 = arith.constant 0 : index
    %c0_58 = arith.constant 0 : index
    %173 = vector.load %arg8[%c0_56, %c0_57, %c0_58] : memref<1x8x32xf32, #tpu.memory_space<vmem>>, vector<1x8x32xf32>
    %174 = vector.shape_cast %173 : vector<1x8x32xf32> to vector<8x32xf32>
    %175 = vector.shape_cast %172 : vector<8x32xf32> to vector<1x8x32xf32>
    tpu.vector_store %arg8[%c0_56, %c0_57, %c0_58], %175 {strides = array<i32>} : memref<1x8x32xf32, #tpu.memory_space<vmem>>, vector<1x8x32xf32>,
    return
  }
  func.func @transform_0(%arg0: i32) -> (i32, i32, i32) {
    %c0_i32 = arith.constant 0 : i32
    %c0_i32_0 = arith.constant 0 : i32
    %c0_i32_1 = arith.constant 0 : i32
    return %arg0, %c0_i32, %c0_i32_0 : i32, i32, i32
  }
  func.func @transform_1(%arg0: i32) -> (i32, i32) {
    %c0_i32 = arith.constant 0 : i32
    %c0_i32_0 = arith.constant 0 : i32
    %c0_i32_1 = arith.constant 0 : i32
    return %c0_i32, %c0_i32_0 : i32, i32
  }
  func.func @transform_2(%arg0: i32) -> (i32, i32) {
    %c0_i32 = arith.constant 0 : i32
    %c0_i32_0 = arith.constant 0 : i32
    %c0_i32_1 = arith.constant 0 : i32
    return %c0_i32, %c0_i32_0 : i32, i32
  }
  func.func @transform_3(%arg0: i32) -> (i32, i32) {
    %c0_i32 = arith.constant 0 : i32
    %c0_i32_0 = arith.constant 0 : i32
    %c0_i32_1 = arith.constant 0 : i32
    return %c0_i32, %c0_i32_0 : i32, i32
  }
  func.func @transform_4(%arg0: i32) -> (i32, i32) {
    %c0_i32 = arith.constant 0 : i32
    %c0_i32_0 = arith.constant 0 : i32
    %c0_i32_1 = arith.constant 0 : i32
    return %c0_i32, %c0_i32_0 : i32, i32
  }
  func.func @transform_5(%arg0: i32) -> (i32, i32) {
    %c0_i32 = arith.constant 0 : i32
    %c0_i32_0 = arith.constant 0 : i32
    %c0_i32_1 = arith.constant 0 : i32
    return %c0_i32, %c0_i32_0 : i32, i32
  }
  func.func @transform_6(%arg0: i32) -> (i32, i32) {
    %c0_i32 = arith.constant 0 : i32
    %c0_i32_0 = arith.constant 0 : i32
    %c0_i32_1 = arith.constant 0 : i32
    return %c0_i32, %c0_i32_0 : i32, i32
  }
  func.func @transform_7(%arg0: i32) -> (i32, i32, i32) {
    %c0_i32 = arith.constant 0 : i32
    %c0_i32_0 = arith.constant 0 : i32
    %c0_i32_1 = arith.constant 0 : i32
    return %arg0, %c0_i32, %c0_i32_0 : i32, i32, i32
  }
}

</mosaic_0001>

<llo_original>
// kernel: tpu_custom_call.1
$region0: #{tpu_custom_call.1}
  #allocation0 [shape = 'u32[]', space=smem, size = 0x4, offset = 0x4, fixed_abs, tag = 'smem constant byte address 0x4 - core index']
  #allocation1 [shape = 'u32[144,128]{1,0:T(1,128)}', space=vmem, size = 0x12000, scoped, tag = 'internal scratch']
  #allocation2 [shape = 'f32[8,32]{1,0:T(8,128)}', space=vmem, size = 0x1000, scoped, tag = 'scratch operand']
  %s0 = inlined_call_operand.vmem [shape: f32[2,8,32], index: 0, kind: input, shape index: {}]
  %s1 = inlined_call_operand.vmem [shape: f32[8,16], index: 1, kind: input, shape index: {}]
  %s2 = inlined_call_operand.vmem [shape: f32[8,16], index: 2, kind: input, shape index: {}]
  %s3 = inlined_call_operand.vmem [shape: bf16[32,96], index: 3, kind: input, shape index: {}]
  %s4 = inlined_call_operand.vmem [shape: bf16[32,32], index: 4, kind: input, shape index: {}]
  %s5 = inlined_call_operand.vmem [shape: bf16[32,128], index: 5, kind: input, shape index: {}]
  %s6 = inlined_call_operand.vmem [shape: bf16[128,32], index: 6, kind: input, shape index: {}]
  %s7 = inlined_call_operand.hbm [shape: f32[2,8,32], index: 7, kind: output, shape index: {}]
  %s8 = sld [smem:[#allocation0]]
  $region61: #{tpu_custom_call.1} parent=0
    _
  %s10 = ssub.s32 1, %s8
  %s11 = scalar_select 0, %s10, %s8
  $region1: #{tpu_custom_call.1} parent=0
    #allocation3 [shape = 'u8[8192]{0}', space=vmem, size = 0x2000, scoped, tag = 'output window, operand 0']
    #allocation4 [shape = 's32[2]{0}', space=sflag, size = 0x8, scoped, tag = 'scoped memory for tpu_custom_call.1']
    %12 = vsyncpa [#allocation4], 0
    %s13 = scalar_lea.sflag [#allocation4], 1
    %14 = vsyncpa %s13, 0
    loop: start=0, step=1, limit=4
    $region2: #{tpu_custom_call.1} parent=1 // loop_pre_header
      _
    $region3: #{tpu_custom_call.1} parent=1 // loop_header
      %s16 = sphi 0, %s20
      %p17 = scmp.ge.s32.totalorder %s16, 4
      %s26 = sphi 0, %s28
      %s29 = sphi 0, %s26
      %s30 = sphi 0, %s29
      %s46 = sphi 0, %s30
      %s50 = sphi 0, %s50
      %s52 = sphi 0, %s50
      %s53 = sphi 0, %s52
      %s67 = sphi 0, %s53
      %s71 = sphi 0, %s71
      %s73 = sphi 0, %s71
      %s74 = sphi 0, %s73
      %s88 = sphi 0, %s74
      %s92 = sphi 0, %s92
      %s94 = sphi 0, %s92
      %s95 = sphi 0, %s94
      %s109 = sphi 0, %s95
      %s113 = sphi 0, %s113
      %s115 = sphi 0, %s113
      %s116 = sphi 0, %s115
      %s130 = sphi 0, %s116
      %s134 = sphi 0, %s134
      %s136 = sphi 0, %s134
      %s137 = sphi 0, %s136
      %s151 = sphi 0, %s137
      %s155 = sphi 0, %s155
      %s157 = sphi 0, %s155
      %s158 = sphi 0, %s157
      %s172 = sphi 0, %s158
      %s178 = sphi 0, %s180
      %s181 = sphi 0, %s178
      %s182 = sphi 0, %s181
      %s198 = sphi 0, %s182
    $region4: #{tpu_custom_call.1} parent=1 // loop_header_branch
      %19 = sbr.rel (%p17) target = $region8
    $region5: #{tpu_custom_call.1} parent=1 // loop_body
      %s21 = ssub.s32 %s16, 1
      %s22 = ssub.s32 %s16, 2
      %s23 = sadd.s32 %s16, 1
      %s24 = ssub.s32 %s16, %s23
      %p25 = scmp.eq.s32.totalorder %s24, 0
      %s27 = sadd.s32 %s26, 1
      %s28 = scalar_select %p25, %s26, %s27
      %p31 = pneg %p25
      %p32 = scmp.eq.s32.totalorder %s16, 1
      %p33 = por %p31, %p32
      %p34 = scmp.ne.s32.totalorder %s26, %s29
      %p35 = scmp.eq.s32.totalorder %s16, 0
      %p36 = por %p34, %p35
      %p37 = scmp.ne.s32.totalorder %s26, %s29
      %p38 = scmp.eq.s32.totalorder %s21, 1
      %p39 = por %p37, %p38
      %p40 = scmp.ne.s32.totalorder %s29, %s30
      %p41 = scmp.eq.s32.totalorder %s21, 0
      %p42 = por %p40, %p41
      %p43 = scmp.ne.s32.totalorder %s29, %s30
      %p44 = scmp.eq.s32.totalorder %s22, 1
      %p45 = por %p43, %p44
      %p47 = scmp.ne.s32.totalorder %s30, %s46
      %p48 = scmp.eq.s32.totalorder %s22, 0
      %p49 = por %p47, %p48
      %s51 = sadd.s32 %s50, 1
      %p54 = scmp.eq.s32.totalorder %s16, 1
      %p55 = scmp.ne.s32.totalorder %s50, %s52
      %p56 = scmp.eq.s32.totalorder %s16, 0
      %p57 = por %p55, %p56
      %p58 = scmp.ne.s32.totalorder %s50, %s52
      %p59 = scmp.eq.s32.totalorder %s21, 1
      %p60 = por %p58, %p59
      %p61 = scmp.ne.s32.totalorder %s52, %s53
      %p62 = scmp.eq.s32.totalorder %s21, 0
      %p63 = por %p61, %p62
      %p64 = scmp.ne.s32.totalorder %s52, %s53
      %p65 = scmp.eq.s32.totalorder %s22, 1
      %p66 = por %p64, %p65
      %p68 = scmp.ne.s32.totalorder %s53, %s67
      %p69 = scmp.eq.s32.totalorder %s22, 0
      %p70 = por %p68, %p69
      %s72 = sadd.s32 %s71, 1
      %p75 = scmp.eq.s32.totalorder %s16, 1
      %p76 = scmp.ne.s32.totalorder %s71, %s73
      %p77 = scmp.eq.s32.totalorder %s16, 0
      %p78 = por %p76, %p77
      %p79 = scmp.ne.s32.totalorder %s71, %s73
      %p80 = scmp.eq.s32.totalorder %s21, 1
      %p81 = por %p79, %p80
      %p82 = scmp.ne.s32.totalorder %s73, %s74
      %p83 = scmp.eq.s32.totalorder %s21, 0
      %p84 = por %p82, %p83
      %p85 = scmp.ne.s32.totalorder %s73, %s74
      %p86 = scmp.eq.s32.totalorder %s22, 1
      %p87 = por %p85, %p86
      %p89 = scmp.ne.s32.totalorder %s74, %s88
      %p90 = scmp.eq.s32.totalorder %s22, 0
      %p91 = por %p89, %p90
      %s93 = sadd.s32 %s92, 1
      %p96 = scmp.eq.s32.totalorder %s16, 1
      %p97 = scmp.ne.s32.totalorder %s92, %s94
      %p98 = scmp.eq.s32.totalorder %s16, 0
      %p99 = por %p97, %p98
      %p100 = scmp.ne.s32.totalorder %s92, %s94
      %p101 = scmp.eq.s32.totalorder %s21, 1
      %p102 = por %p100, %p101
      %p103 = scmp.ne.s32.totalorder %s94, %s95
      %p104 = scmp.eq.s32.totalorder %s21, 0
      %p105 = por %p103, %p104
      %p106 = scmp.ne.s32.totalorder %s94, %s95
      %p107 = scmp.eq.s32.totalorder %s22, 1
      %p108 = por %p106, %p107
      %p110 = scmp.ne.s32.totalorder %s95, %s109
      %p111 = scmp.eq.s32.totalorder %s22, 0
      %p112 = por %p110, %p111
      %s114 = sadd.s32 %s113, 1
      %p117 = scmp.eq.s32.totalorder %s16, 1
      %p118 = scmp.ne.s32.totalorder %s113, %s115
      %p119 = scmp.eq.s32.totalorder %s16, 0
      %p120 = por %p118, %p119
      %p121 = scmp.ne.s32.totalorder %s113, %s115
      %p122 = scmp.eq.s32.totalorder %s21, 1
      %p123 = por %p121, %p122
      %p124 = scmp.ne.s32.totalorder %s115, %s116
      %p125 = scmp.eq.s32.totalorder %s21, 0
      %p126 = por %p124, %p125
      %p127 = scmp.ne.s32.totalorder %s115, %s116
      %p128 = scmp.eq.s32.totalorder %s22, 1
      %p129 = por %p127, %p128
      %p131 = scmp.ne.s32.totalorder %s116, %s130
      %p132 = scmp.eq.s32.totalorder %s22, 0
      %p133 = por %p131, %p132
      %s135 = sadd.s32 %s134, 1
      %p138 = scmp.eq.s32.totalorder %s16, 1
      %p139 = scmp.ne.s32.totalorder %s134, %s136
      %p140 = scmp.eq.s32.totalorder %s16, 0
      %p141 = por %p139, %p140
      %p142 = scmp.ne.s32.totalorder %s134, %s136
      %p143 = scmp.eq.s32.totalorder %s21, 1
      %p144 = por %p142, %p143
      %p145 = scmp.ne.s32.totalorder %s136, %s137
      %p146 = scmp.eq.s32.totalorder %s21, 0
      %p147 = por %p145, %p146
      %p148 = scmp.ne.s32.totalorder %s136, %s137
      %p149 = scmp.eq.s32.totalorder %s22, 1
      %p150 = por %p148, %p149
      %p152 = scmp.ne.s32.totalorder %s137, %s151
      %p153 = scmp.eq.s32.totalorder %s22, 0
      %p154 = por %p152, %p153
      %s156 = sadd.s32 %s155, 1
      %p159 = scmp.eq.s32.totalorder %s16, 1
      %p160 = scmp.ne.s32.totalorder %s155, %s157
      %p161 = scmp.eq.s32.totalorder %s16, 0
      %p162 = por %p160, %p161
      %p163 = scmp.ne.s32.totalorder %s155, %s157
      %p164 = scmp.eq.s32.totalorder %s21, 1
      %p165 = por %p163, %p164
      %p166 = scmp.ne.s32.totalorder %s157, %s158
      %p167 = scmp.eq.s32.totalorder %s21, 0
      %p168 = por %p166, %p167
      %p169 = scmp.ne.s32.totalorder %s157, %s158
      %p170 = scmp.eq.s32.totalorder %s22, 1
      %p171 = por %p169, %p170
      %p173 = scmp.ne.s32.totalorder %s158, %s172
      %p174 = scmp.eq.s32.totalorder %s22, 0
      %p175 = por %p173, %p174
      %s176 = ssub.s32 %s16, %s23
      %p177 = scmp.eq.s32.totalorder %s176, 0
      %s179 = sadd.s32 %s178, 1
      %s180 = scalar_select %p177, %s178, %s179
      %p183 = pneg %p177
      %p184 = scmp.eq.s32.totalorder %s16, 1
      %p185 = por %p183, %p184
      %p186 = scmp.ne.s32.totalorder %s178, %s181
      %p187 = scmp.eq.s32.totalorder %s16, 0
      %p188 = por %p186, %p187
      %p189 = scmp.ne.s32.totalorder %s178, %s181
      %p190 = scmp.eq.s32.totalorder %s21, 1
      %p191 = por %p189, %p190
      %p192 = scmp.ne.s32.totalorder %s181, %s182
      %p193 = scmp.eq.s32.totalorder %s21, 0
      %p194 = por %p192, %p193
      %p195 = scmp.ne.s32.totalorder %s181, %s182
      %p196 = scmp.eq.s32.totalorder %s22, 1
      %p197 = por %p195, %p196
      %p199 = scmp.ne.s32.totalorder %s182, %s198
      %p200 = scmp.eq.s32.totalorder %s22, 0
      %p201 = por %p199, %p200
      %p202 = scmp.le.s32.totalorder 1, %s16
      %p203 = scmp.lt.s32.totalorder %s16, 3
      %p204 = pnand %p202, %p203
      %p205 = pneg %p204
      // Predicated region
      $region9: #{tpu_custom_call.1} parent=5 // pred_check
        _
      $region10: #{tpu_custom_call.1} parent=5 // pred_check_branch
        %207 = sbr.rel (%p204) target = $region12
      $region11: #{tpu_custom_call.1} parent=5 // pred_region
        %s208 = ssub.s32 %s16, 1
        // Predicated region
        $region13: #{tpu_custom_call.1} parent=11 // pred_check
          %p209 = pneg %p63
        $region14: #{tpu_custom_call.1} parent=11 // pred_check_branch
          %211 = sbr.rel (%p209) target = $region16
        $region15: #{tpu_custom_call.1} parent=11 // pred_region
          _
        $region16: #{tpu_custom_call.1} parent=11 // pred_fallthru
          _
        // Predicated region
        $region17: #{tpu_custom_call.1} parent=11 // pred_check
          %p212 = pneg %p84
        $region18: #{tpu_custom_call.1} parent=11 // pred_check_branch
          %214 = sbr.rel (%p212) target = $region20
        $region19: #{tpu_custom_call.1} parent=11 // pred_region
          _
        $region20: #{tpu_custom_call.1} parent=11 // pred_fallthru
          _
        // Predicated region
        $region21: #{tpu_custom_call.1} parent=11 // pred_check
          %p215 = pneg %p105
        $region22: #{tpu_custom_call.1} parent=11 // pred_check_branch
          %217 = sbr.rel (%p215) target = $region24
        $region23: #{tpu_custom_call.1} parent=11 // pred_region
          _
        $region24: #{tpu_custom_call.1} parent=11 // pred_fallthru
          _
        // Predicated region
        $region25: #{tpu_custom_call.1} parent=11 // pred_check
          %p218 = pneg %p126
        $region26: #{tpu_custom_call.1} parent=11 // pred_check_branch
          %220 = sbr.rel (%p218) target = $region28
        $region27: #{tpu_custom_call.1} parent=11 // pred_region
          _
        $region28: #{tpu_custom_call.1} parent=11 // pred_fallthru
          _
        // Predicated region
        $region29: #{tpu_custom_call.1} parent=11 // pred_check
          %p221 = pneg %p147
        $region30: #{tpu_custom_call.1} parent=11 // pred_check_branch
          %223 = sbr.rel (%p221) target = $region32
        $region31: #{tpu_custom_call.1} parent=11 // pred_region
          _
        $region32: #{tpu_custom_call.1} parent=11 // pred_fallthru
          _
        // Predicated region
        $region33: #{tpu_custom_call.1} parent=11 // pred_check
          %p224 = pneg %p168
        $region34: #{tpu_custom_call.1} parent=11 // pred_check_branch
          %226 = sbr.rel (%p224) target = $region36
        $region35: #{tpu_custom_call.1} parent=11 // pred_region
          _
        $region36: #{tpu_custom_call.1} parent=11 // pred_fallthru
          _
      $region12: #{tpu_custom_call.1} parent=5 // pred_fallthru
        _
      %p227 = scmp.lt.s32.totalorder %s16, 2
      // Predicated region
      $region37: #{tpu_custom_call.1} parent=5 // pred_check
        %p228 = pneg %p227
      $region38: #{tpu_custom_call.1} parent=5 // pred_check_branch
        %230 = sbr.rel (%p228) target = $region40
      $region39: #{tpu_custom_call.1} parent=5 // pred_region
        // Predicated region
        $region41: #{tpu_custom_call.1} parent=39 // pred_check
          %p231 = pneg %p36
        $region42: #{tpu_custom_call.1} parent=39 // pred_check_branch
          %233 = sbr.rel (%p231) target = $region44
        $region43: #{tpu_custom_call.1} parent=39 // pred_region
          %p234 = scmp.lt.s32.totalorder %s16, 1
          %s235 = scalar_select %p234, %s16, 1
          %s236 = smul.addr %s235, 8
          %s237 = scalar_lea.vmem %s0, %s236
        $region44: #{tpu_custom_call.1} parent=39 // pred_fallthru
          _
      $region40: #{tpu_custom_call.1} parent=5 // pred_fallthru
        _
      %p238 = scmp.le.s32.totalorder 1, %s16
      %p239 = scmp.lt.s32.totalorder %s16, 3
      %p240 = pnand %p238, %p239
      %p241 = pneg %p240
      // Predicated region
      $region45: #{tpu_custom_call.1} parent=5 // pred_check
        _
      $region46: #{tpu_custom_call.1} parent=5 // pred_check_branch
        %243 = sbr.rel (%p240) target = $region48
      $region47: #{tpu_custom_call.1} parent=5 // pred_region
        %s244 = ssub.s32 %s16, 1
        %p245 = scmp.lt.s32.totalorder %s21, 1
        %s246 = scalar_select %p245, %s21, 1
        %s247 = smul.addr %s246, 8
        %s248 = scalar_lea.vmem %s0, %s247
        %p249 = pneg %p42
        %p250 = pneg %p39
        %p251 = pneg %p63
        %p252 = pneg %p60
        %p253 = pneg %p84
        %p254 = pneg %p81
        %p255 = pneg %p105
        %p256 = pneg %p102
        %p257 = pneg %p126
        %p258 = pneg %p123
        %p259 = pneg %p147
        %p260 = pneg %p144
        %p261 = pneg %p168
        %p262 = pneg %p165
        %p263 = pneg %p194
        %p264 = pneg %p191
        %s265 = sand.u32 %s181, 1
        %s266 = scalar_lea.sflag [#allocation4], %s265
        %s267 = sand.u32 %s181, 1
        %s268 = smul.addr %s267, 8
        %s269 = scalar_lea.vmem [#allocation3], %s268
        %p270 = scmp.lt.s32.totalorder %s21, 1
        %s271 = scalar_select %p270, %s21, 1
        %s272 = smul.addr %s271, 8
        %s273 = scalar_lea.vmem %s0, %s272
        %v275 = vld [vmem:[%s273] sm:$0xff]
        %v276 = vld [vmem:[%s1] sm:$0xff]
        %v277 = vld [vmem:[%s2] sm:$0xff]
        %v278 = vmul.f32 %v275, %v275
        %vm279 = vcmask 261120
        %v280 = vsel %vm279, %v278, 0.0
        %281 = vadd.xlane.f32.xlu0 %v280
        %v282 = vpop.xlane.xlu0 %281
        %v283 = vrcp.pop 32.0
        %v284 = vmul.f32 %v282, %v283
        %v285 = vadd.f32 %v284, 1e-06
        %v286 = vrsqrt.pop %v285
        %v287 = vmul.f32 %v275, %v286
        %v288 = vpack.c.bf16 %v287, %v287
        %v289 = vld [vmem:[%s3] sm:$0xf]
        %v290 = vld [vmem:[%s3 + $0x4] sm:$0xf]
        %v291 = vld [vmem:[%s3 + $0x8] sm:$0xf]
        %v292 = vld [vmem:[%s3 + $0xc] sm:$0xf]
        %v297 = vunpack.c.l.b16 %v289
        %v298 = vunpack.c.l.b16 %v290
        %v299 = vunpack.c.l.b16 %v291
        %v300 = vunpack.c.l.b16 %v292
        %v301 = vpack.c.b16 %v298, %v297
        %v302 = vpack.c.b16 %v300, %v299
        %v306 = vsel %vm279, %v288, 0
        %308 = vmatprep.subr.bf16.mxu0 0
        %309 = vmatpush1.bf16.msra.mxu0 %v301
        %310 = vmatprep.subr.bf16.mxu0 0
        %311 = vmatpush1.bf16.msra.mxu0 %v302
        %312 = vmatprep.subr.bf16.mxu0 0
        %313 = vmatpush1.bf16.msra.mxu0 0
        %314 = vmatprep.subr.bf16.mxu0 0
        %315 = vmatpush1.bf16.msra.mxu0 0
        %316 = vmatprep.subr.bf16.mxu0 0
        %317 = vmatpush1.bf16.msra.mxu0 0
        %318 = vmatprep.subr.bf16.mxu0 0
        %319 = vmatpush1.bf16.msra.mxu0 0
        %320 = vmatprep.subr.bf16.mxu0 0
        %321 = vmatpush1.bf16.msra.mxu0 0
        %322 = vmatprep.subr.bf16.mxu0 0
        %323 = vmatpush1.bf16.msra.mxu0 0
        %324 = vmatprep.subr.bf16.mxu0 0
        %325 = vmatpush1.bf16.msra.mxu0 0
        %326 = vmatprep.subr.bf16.mxu0 0
        %327 = vmatpush1.bf16.msra.mxu0 0
        %328 = vmatprep.subr.bf16.mxu0 0
        %329 = vmatpush1.bf16.msra.mxu0 0
        %330 = vmatprep.subr.bf16.mxu0 0
        %331 = vmatpush1.bf16.msra.mxu0 0
        %332 = vmatprep.subr.bf16.mxu0 0
        %333 = vmatpush1.bf16.msra.mxu0 0
        %334 = vmatprep.subr.bf16.mxu0 0
        %335 = vmatpush1.bf16.msra.mxu0 0
        %336 = vmatprep.subr.bf16.mxu0 0
        %337 = vmatpush1.bf16.msra.mxu0 0
        %338 = vmatprep.subr.bf16.mxu0 0
        %339 = vmatpush1.bf16.msra.mxu0 0
        %340 = vmatprep.mubr.bf16.mxu0 0
        %341 = vmatmul.mubr.bf16.gmra.mrb[0].mxu0 %v306
        %v342 = vpop.f32.mrb[0].mxu0
        %v343 = vadd.f32 0.0, %v342
        %v344 = vpop.f32.mrb[0].mxu0
        %v345 = vpop.f32.mrb[0].mxu0
        %v346 = vpop.f32.mrb[0].mxu0
        %347 = vdwg.mxu0
        %v348 = vmul.f32 %v343, %v276
        %350 = vrot.lane.b32.xlu0 %v277, 16
        %v351 = vpop.permute.xlu0 %350
        %v353 = vmul.f32 %v343, %v351
        %355 = vrot.lane.b32.xlu0 %v353, 112
        %v356 = vpop.permute.xlu0 %355
        %v358 = vadd.f32 %v348, %v356
        %v359 = vpack.c.bf16 %v358, %v358
        %361 = vrot.lane.b32.xlu0 %v276, 16
        %v362 = vpop.permute.xlu0 %361
        %v364 = vmul.f32 %v343, %v362
        %v365 = vmul.f32 %v343, %v277
        %367 = vrot.lane.b32.xlu0 %v365, 16
        %v368 = vpop.permute.xlu0 %367
        %v370 = vsub.f32 %v364, %v368
        %v371 = vpack.c.bf16 %v370, %v370
        %372 = vrot.lane.b32.xlu0 %v276, 32
        %v373 = vpop.permute.xlu0 %372
        %v375 = vmul.f32 %v343, %v373
        %376 = vrot.lane.b32.xlu0 %v277, 48
        %v377 = vpop.permute.xlu0 %376
        %v379 = vmul.f32 %v343, %v377
        %381 = vrot.lane.b32.xlu0 %v379, 112
        %v382 = vpop.permute.xlu0 %381
        %v384 = vadd.f32 %v375, %v382
        %v385 = vpack.c.bf16 %v384, %v384
        %386 = vrot.lane.b32.xlu0 %v276, 48
        %v387 = vpop.permute.xlu0 %386
        %v389 = vmul.f32 %v343, %v387
        %390 = vrot.lane.b32.xlu0 %v277, 32
        %v391 = vpop.permute.xlu0 %390
        %v393 = vmul.f32 %v343, %v391
        %395 = vrot.lane.b32.xlu0 %v393, 16
        %v396 = vpop.permute.xlu0 %395
        %v398 = vsub.f32 %v389, %v396
        %v399 = vpack.c.bf16 %v398, %v398
        %v400 = vpack.c.bf16 %v343, %v343
        %v401 = vlaneseq
        %v402 = vshrl.u32 %v401, 7
        %v403 = vlaneseq
        %v404 = vand.u32 %v403, 127
        %vm405 = vcmp.ge.s32.totalorder %v402, %v404
        %v406 = vsel %vm405, 0.0, -1e+30
        %408 = vrot.lane.b32.xlu0 %v371, 116
        %v409 = vpop.permute.xlu0 %408
        %vm410 = vcmask 31744
        %v413 = vsel %vm410, %v359, %v409
        %415 = vrot.lane.b32.xlu0 %v385, 96
        %v416 = vpop.permute.xlu0 %415
        %418 = vrot.lane.b32.xlu0 %v399, 84
        %v419 = vpop.permute.xlu0 %418
        %v422 = vsel %vm410, %v416, %v419
        %vm423 = vcmask 64512
        %v424 = vsel %vm423, %v413, 0
        %v426 = vsel %vm423, %v422, 0
        %428 = vmatprep.subr.bf16.mxu0 0
        %429 = vmatpush1.bf16.xpose.msra.mxu0 %v426
        %430 = vmatprep.subr.bf16.mxu0 0
        %431 = vmatpush1.bf16.xpose.msra.mxu0 0
        %432 = vmatprep.subr.bf16.mxu0 0
        %433 = vmatpush1.bf16.xpose.msra.mxu0 0
        %434 = vmatprep.subr.bf16.mxu0 0
        %435 = vmatpush1.bf16.xpose.msra.mxu0 0
        %436 = vmatprep.subr.bf16.mxu0 0
        %437 = vmatpush1.bf16.xpose.msra.mxu0 0
        %438 = vmatprep.subr.bf16.mxu0 0
        %439 = vmatpush1.bf16.xpose.msra.mxu0 0
        %440 = vmatprep.subr.bf16.mxu0 0
        %441 = vmatpush1.bf16.xpose.msra.mxu0 0
        %442 = vmatprep.subr.bf16.mxu0 0
        %443 = vmatpush1.bf16.xpose.msra.mxu0 0
        %444 = vmatprep.subr.bf16.mxu0 0
        %445 = vmatpush1.bf16.xpose.msra.mxu0 0
        %446 = vmatprep.subr.bf16.mxu0 0
        %447 = vmatpush1.bf16.xpose.msra.mxu0 0
        %448 = vmatprep.subr.bf16.mxu0 0
        %449 = vmatpush1.bf16.xpose.msra.mxu0 0
        %450 = vmatprep.subr.bf16.mxu0 0
        %451 = vmatpush1.bf16.xpose.msra.mxu0 0
        %452 = vmatprep.subr.bf16.mxu0 0
        %453 = vmatpush1.bf16.xpose.msra.mxu0 0
        %454 = vmatprep.subr.bf16.mxu0 0
        %455 = vmatpush1.bf16.xpose.msra.mxu0 0
        %456 = vmatprep.subr.bf16.mxu0 0
        %457 = vmatpush1.bf16.xpose.msra.mxu0 0
        %458 = vmatprep.subr.bf16.mxu0 0
        %459 = vmatpush1.bf16.xpose.msra.mxu0 0
        %460 = vmatprep.mubr.bf16.mxu0 0
        %461 = vmatmul.mubr.bf16.gmra.mrb[0].mxu0 %v424
        %v462 = vpop.f32.mrb[0].mxu0
        %v463 = vadd.f32 0.0, %v462
        %v464 = vpop.f32.mrb[0].mxu0
        %v465 = vpop.f32.mrb[0].mxu0
        %v466 = vpop.f32.mrb[0].mxu0
        %467 = vdwg.mxu0
        %v468 = vmul.f32 %v463, 0.35355338
        %v469 = vadd.f32 %v468, %v406
        %v470 = vsel %vm423, %v469, -inf
        %471 = vmax.xlane.f32.xlu0 %v470
        %v472 = vpop.xlane.xlu0 %471
        %v473 = vsub.f32 %v469, %v472
        %v474 = vmul.f32 %v473, 1.442695
        %v475 = vpow.pop %v474
        %v476 = vsel %vm423, %v475, 0.0
        %477 = vadd.xlane.f32.xlu0 %v476
        %v478 = vpop.xlane.xlu0 %477
        %v479 = vrcp.pop %v478
        %v480 = vmul.f32 %v475, %v479
        %v481 = vpack.c.bf16 %v480, %v480
        %483 = vrot.lane.b32.xlu0 %v400, 64
        %v484 = vpop.permute.xlu0 %483
        %v486 = vsel %vm423, %v481, 0
        %vm488 = vcmask 1043456
        %v490 = vsel %vm488, %v484, 0
        %492 = vmatprep.subr.bf16.mxu0 0
        %493 = vmatpush1.bf16.msra.mxu0 %v490
        %494 = vmatprep.subr.bf16.mxu0 0
        %495 = vmatpush1.bf16.msra.mxu0 0
        %496 = vmatprep.subr.bf16.mxu0 0
        %497 = vmatpush1.bf16.msra.mxu0 0
        %498 = vmatprep.subr.bf16.mxu0 0
        %499 = vmatpush1.bf16.msra.mxu0 0
        %500 = vmatprep.subr.bf16.mxu0 0
        %501 = vmatpush1.bf16.msra.mxu0 0
        %502 = vmatprep.subr.bf16.mxu0 0
        %503 = vmatpush1.bf16.msra.mxu0 0
        %504 = vmatprep.subr.bf16.mxu0 0
        %505 = vmatpush1.bf16.msra.mxu0 0
        %506 = vmatprep.subr.bf16.mxu0 0
        %507 = vmatpush1.bf16.msra.mxu0 0
        %508 = vmatprep.subr.bf16.mxu0 0
        %509 = vmatpush1.bf16.msra.mxu0 0
        %510 = vmatprep.subr.bf16.mxu0 0
        %511 = vmatpush1.bf16.msra.mxu0 0
        %512 = vmatprep.subr.bf16.mxu0 0
        %513 = vmatpush1.bf16.msra.mxu0 0
        %514 = vmatprep.subr.bf16.mxu0 0
        %515 = vmatpush1.bf16.msra.mxu0 0
        %516 = vmatprep.subr.bf16.mxu0 0
        %517 = vmatpush1.bf16.msra.mxu0 0
        %518 = vmatprep.subr.bf16.mxu0 0
        %519 = vmatpush1.bf16.msra.mxu0 0
        %520 = vmatprep.subr.bf16.mxu0 0
        %521 = vmatpush1.bf16.msra.mxu0 0
        %522 = vmatprep.subr.bf16.mxu0 0
        %523 = vmatpush1.bf16.msra.mxu0 0
        %524 = vmatprep.mubr.bf16.mxu0 0
        %525 = vmatmul.mubr.bf16.gmra.mrb[0].mxu0 %v486
        %v526 = vpop.f32.mrb[0].mxu0
        %v527 = vadd.f32 0.0, %v526
        %v528 = vpop.f32.mrb[0].mxu0
        %v529 = vpop.f32.mrb[0].mxu0
        %v530 = vpop.f32.mrb[0].mxu0
        %531 = vdwg.mxu0
        %532 = vst.msk [vmem:[#allocation2] sm:$0xff] %vm423, %v527
        %534 = vrot.lane.b32.xlu0 %v359, 124
        %v535 = vpop.permute.xlu0 %534
        %536 = vrot.lane.b32.xlu0 %v371, 112
        %v537 = vpop.permute.xlu0 %536
        %v540 = vsel %vm410, %v535, %v537
        %541 = vrot.lane.b32.xlu0 %v385, 92
        %v542 = vpop.permute.xlu0 %541
        %543 = vrot.lane.b32.xlu0 %v399, 80
        %v544 = vpop.permute.xlu0 %543
        %v547 = vsel %vm410, %v542, %v544
        %v548 = vsel %vm423, %v540, 0
        %v550 = vsel %vm423, %v547, 0
        %552 = vmatprep.subr.bf16.mxu0 0
        %553 = vmatpush1.bf16.xpose.msra.mxu0 %v550
        %554 = vmatprep.subr.bf16.mxu0 0
        %555 = vmatpush1.bf16.xpose.msra.mxu0 0
        %556 = vmatprep.subr.bf16.mxu0 0
        %557 = vmatpush1.bf16.xpose.msra.mxu0 0
        %558 = vmatprep.subr.bf16.mxu0 0
        %559 = vmatpush1.bf16.xpose.msra.mxu0 0
        %560 = vmatprep.subr.bf16.mxu0 0
        %561 = vmatpush1.bf16.xpose.msra.mxu0 0
        %562 = vmatprep.subr.bf16.mxu0 0
        %563 = vmatpush1.bf16.xpose.msra.mxu0 0
        %564 = vmatprep.subr.bf16.mxu0 0
        %565 = vmatpush1.bf16.xpose.msra.mxu0 0
        %566 = vmatprep.subr.bf16.mxu0 0
        %567 = vmatpush1.bf16.xpose.msra.mxu0 0
        %568 = vmatprep.subr.bf16.mxu0 0
        %569 = vmatpush1.bf16.xpose.msra.mxu0 0
        %570 = vmatprep.subr.bf16.mxu0 0
        %571 = vmatpush1.bf16.xpose.msra.mxu0 0
        %572 = vmatprep.subr.bf16.mxu0 0
        %573 = vmatpush1.bf16.xpose.msra.mxu0 0
        %574 = vmatprep.subr.bf16.mxu0 0
        %575 = vmatpush1.bf16.xpose.msra.mxu0 0
        %576 = vmatprep.subr.bf16.mxu0 0
        %577 = vmatpush1.bf16.xpose.msra.mxu0 0
        %578 = vmatprep.subr.bf16.mxu0 0
        %579 = vmatpush1.bf16.xpose.msra.mxu0 0
        %580 = vmatprep.subr.bf16.mxu0 0
        %581 = vmatpush1.bf16.xpose.msra.mxu0 0
        %582 = vmatprep.subr.bf16.mxu0 0
        %583 = vmatpush1.bf16.xpose.msra.mxu0 0
        %584 = vmatprep.mubr.bf16.mxu0 0
        %585 = vmatmul.mubr.bf16.gmra.mrb[0].mxu0 %v548
        %v586 = vpop.f32.mrb[0].mxu0
        %v587 = vadd.f32 0.0, %v586
        %v588 = vpop.f32.mrb[0].mxu0
        %v589 = vpop.f32.mrb[0].mxu0
        %v590 = vpop.f32.mrb[0].mxu0
        %591 = vdwg.mxu0
        %v592 = vmul.f32 %v587, 0.35355338
        %v593 = vadd.f32 %v592, %v406
        %v594 = vsel %vm423, %v593, -inf
        %595 = vmax.xlane.f32.xlu0 %v594
        %v596 = vpop.xlane.xlu0 %595
        %v597 = vsub.f32 %v593, %v596
        %v598 = vmul.f32 %v597, 1.442695
        %v599 = vpow.pop %v598
        %v600 = vsel %vm423, %v599, 0.0
        %601 = vadd.xlane.f32.xlu0 %v600
        %v602 = vpop.xlane.xlu0 %601
        %v603 = vrcp.pop %v602
        %v604 = vmul.f32 %v599, %v603
        %v605 = vpack.c.bf16 %v604, %v604
        %606 = vrot.lane.b32.xlu0 %v400, 56
        %v607 = vpop.permute.xlu0 %606
        %v609 = vsel %vm423, %v605, 0
        %v612 = vsel %vm488, %v607, 0
        %614 = vmatprep.subr.bf16.mxu0 0
        %615 = vmatpush1.bf16.msra.mxu0 %v612
        %616 = vmatprep.subr.bf16.mxu0 0
        %617 = vmatpush1.bf16.msra.mxu0 0
        %618 = vmatprep.subr.bf16.mxu0 0
        %619 = vmatpush1.bf16.msra.mxu0 0
        %620 = vmatprep.subr.bf16.mxu0 0
        %621 = vmatpush1.bf16.msra.mxu0 0
        %622 = vmatprep.subr.bf16.mxu0 0
        %623 = vmatpush1.bf16.msra.mxu0 0
        %624 = vmatprep.subr.bf16.mxu0 0
        %625 = vmatpush1.bf16.msra.mxu0 0
        %626 = vmatprep.subr.bf16.mxu0 0
        %627 = vmatpush1.bf16.msra.mxu0 0
        %628 = vmatprep.subr.bf16.mxu0 0
        %629 = vmatpush1.bf16.msra.mxu0 0
        %630 = vmatprep.subr.bf16.mxu0 0
        %631 = vmatpush1.bf16.msra.mxu0 0
        %632 = vmatprep.subr.bf16.mxu0 0
        %633 = vmatpush1.bf16.msra.mxu0 0
        %634 = vmatprep.subr.bf16.mxu0 0
        %635 = vmatpush1.bf16.msra.mxu0 0
        %636 = vmatprep.subr.bf16.mxu0 0
        %637 = vmatpush1.bf16.msra.mxu0 0
        %638 = vmatprep.subr.bf16.mxu0 0
        %639 = vmatpush1.bf16.msra.mxu0 0
        %640 = vmatprep.subr.bf16.mxu0 0
        %641 = vmatpush1.bf16.msra.mxu0 0
        %642 = vmatprep.subr.bf16.mxu0 0
        %643 = vmatpush1.bf16.msra.mxu0 0
        %644 = vmatprep.subr.bf16.mxu0 0
        %645 = vmatpush1.bf16.msra.mxu0 0
        %646 = vmatprep.mubr.bf16.mxu0 0
        %647 = vmatmul.mubr.bf16.gmra.mrb[0].mxu0 %v609
        %v648 = vpop.f32.mrb[0].mxu0
        %v649 = vadd.f32 0.0, %v648
        %v650 = vpop.f32.mrb[0].mxu0
        %v651 = vpop.f32.mrb[0].mxu0
        %v652 = vpop.f32.mrb[0].mxu0
        %653 = vdwg.mxu0
        %655 = vrot.lane.b32.xlu0 %v649, 8
        %v656 = vpop.permute.xlu0 %655
        %vm658 = vcmask 130112
        %659 = vst.msk [vmem:[#allocation2] sm:$0xff] %vm658, %v656
        %660 = vrot.lane.b32.xlu0 %v359, 120
        %v661 = vpop.permute.xlu0 %660
        %662 = vrot.lane.b32.xlu0 %v371, 108
        %v663 = vpop.permute.xlu0 %662
        %v666 = vsel %vm410, %v661, %v663
        %667 = vrot.lane.b32.xlu0 %v385, 88
        %v668 = vpop.permute.xlu0 %667
        %669 = vrot.lane.b32.xlu0 %v399, 76
        %v670 = vpop.permute.xlu0 %669
        %v673 = vsel %vm410, %v668, %v670
        %v674 = vsel %vm423, %v666, 0
        %v676 = vsel %vm423, %v673, 0
        %678 = vmatprep.subr.bf16.mxu0 0
        %679 = vmatpush1.bf16.xpose.msra.mxu0 %v676
        %680 = vmatprep.subr.bf16.mxu0 0
        %681 = vmatpush1.bf16.xpose.msra.mxu0 0
        %682 = vmatprep.subr.bf16.mxu0 0
        %683 = vmatpush1.bf16.xpose.msra.mxu0 0
        %684 = vmatprep.subr.bf16.mxu0 0
        %685 = vmatpush1.bf16.xpose.msra.mxu0 0
        %686 = vmatprep.subr.bf16.mxu0 0
        %687 = vmatpush1.bf16.xpose.msra.mxu0 0
        %688 = vmatprep.subr.bf16.mxu0 0
        %689 = vmatpush1.bf16.xpose.msra.mxu0 0
        %690 = vmatprep.subr.bf16.mxu0 0
        %691 = vmatpush1.bf16.xpose.msra.mxu0 0
        %692 = vmatprep.subr.bf16.mxu0 0
        %693 = vmatpush1.bf16.xpose.msra.mxu0 0
        %694 = vmatprep.subr.bf16.mxu0 0
        %695 = vmatpush1.bf16.xpose.msra.mxu0 0
        %696 = vmatprep.subr.bf16.mxu0 0
        %697 = vmatpush1.bf16.xpose.msra.mxu0 0
        %698 = vmatprep.subr.bf16.mxu0 0
        %699 = vmatpush1.bf16.xpose.msra.mxu0 0
        %700 = vmatprep.subr.bf16.mxu0 0
        %701 = vmatpush1.bf16.xpose.msra.mxu0 0
        %702 = vmatprep.subr.bf16.mxu0 0
        %703 = vmatpush1.bf16.xpose.msra.mxu0 0
        %704 = vmatprep.subr.bf16.mxu0 0
        %705 = vmatpush1.bf16.xpose.msra.mxu0 0
        %706 = vmatprep.subr.bf16.mxu0 0
        %707 = vmatpush1.bf16.xpose.msra.mxu0 0
        %708 = vmatprep.subr.bf16.mxu0 0
        %709 = vmatpush1.bf16.xpose.msra.mxu0 0
        %710 = vmatprep.mubr.bf16.mxu0 0
        %711 = vmatmul.mubr.bf16.gmra.mrb[0].mxu0 %v674
        %v712 = vpop.f32.mrb[0].mxu0
        %v713 = vadd.f32 0.0, %v712
        %v714 = vpop.f32.mrb[0].mxu0
        %v715 = vpop.f32.mrb[0].mxu0
        %v716 = vpop.f32.mrb[0].mxu0
        %717 = vdwg.mxu0
        %v718 = vmul.f32 %v713, 0.35355338
        %v719 = vadd.f32 %v718, %v406
        %v720 = vsel %vm423, %v719, -inf
        %721 = vmax.xlane.f32.xlu0 %v720
        %v722 = vpop.xlane.xlu0 %721
        %v723 = vsub.f32 %v719, %v722
        %v724 = vmul.f32 %v723, 1.442695
        %v725 = vpow.pop %v724
        %v726 = vsel %vm423, %v725, 0.0
        %727 = vadd.xlane.f32.xlu0 %v726
        %v728 = vpop.xlane.xlu0 %727
        %v729 = vrcp.pop %v728
        %v730 = vmul.f32 %v725, %v729
        %v731 = vpack.c.bf16 %v730, %v730
        %732 = vrot.lane.b32.xlu0 %v400, 48
        %v733 = vpop.permute.xlu0 %732
        %v735 = vsel %vm423, %v731, 0
        %v738 = vsel %vm488, %v733, 0
        %740 = vmatprep.subr.bf16.mxu0 0
        %741 = vmatpush1.bf16.msra.mxu0 %v738
        %742 = vmatprep.subr.bf16.mxu0 0
        %743 = vmatpush1.bf16.msra.mxu0 0
        %744 = vmatprep.subr.bf16.mxu0 0
        %745 = vmatpush1.bf16.msra.mxu0 0
        %746 = vmatprep.subr.bf16.mxu0 0
        %747 = vmatpush1.bf16.msra.mxu0 0
        %748 = vmatprep.subr.bf16.mxu0 0
        %749 = vmatpush1.bf16.msra.mxu0 0
        %750 = vmatprep.subr.bf16.mxu0 0
        %751 = vmatpush1.bf16.msra.mxu0 0
        %752 = vmatprep.subr.bf16.mxu0 0
        %753 = vmatpush1.bf16.msra.mxu0 0
        %754 = vmatprep.subr.bf16.mxu0 0
        %755 = vmatpush1.bf16.msra.mxu0 0
        %756 = vmatprep.subr.bf16.mxu0 0
        %757 = vmatpush1.bf16.msra.mxu0 0
        %758 = vmatprep.subr.bf16.mxu0 0
        %759 = vmatpush1.bf16.msra.mxu0 0
        %760 = vmatprep.subr.bf16.mxu0 0
        %761 = vmatpush1.bf16.msra.mxu0 0
        %762 = vmatprep.subr.bf16.mxu0 0
        %763 = vmatpush1.bf16.msra.mxu0 0
        %764 = vmatprep.subr.bf16.mxu0 0
        %765 = vmatpush1.bf16.msra.mxu0 0
        %766 = vmatprep.subr.bf16.mxu0 0
        %767 = vmatpush1.bf16.msra.mxu0 0
        %768 = vmatprep.subr.bf16.mxu0 0
        %769 = vmatpush1.bf16.msra.mxu0 0
        %770 = vmatprep.subr.bf16.mxu0 0
        %771 = vmatpush1.bf16.msra.mxu0 0
        %772 = vmatprep.mubr.bf16.mxu0 0
        %773 = vmatmul.mubr.bf16.gmra.mrb[0].mxu0 %v735
        %v774 = vpop.f32.mrb[0].mxu0
        %v775 = vadd.f32 0.0, %v774
        %v776 = vpop.f32.mrb[0].mxu0
        %v777 = vpop.f32.mrb[0].mxu0
        %v778 = vpop.f32.mrb[0].mxu0
        %779 = vdwg.mxu0
        %781 = vrot.lane.b32.xlu0 %v775, 16
        %v782 = vpop.permute.xlu0 %781
        %vm784 = vcmask 195712
        %785 = vst.msk [vmem:[#allocation2] sm:$0xff] %vm784, %v782
        %786 = vrot.lane.b32.xlu0 %v359, 116
        %v787 = vpop.permute.xlu0 %786
        %788 = vrot.lane.b32.xlu0 %v371, 104
        %v789 = vpop.permute.xlu0 %788
        %v792 = vsel %vm410, %v787, %v789
        %793 = vrot.lane.b32.xlu0 %v385, 84
        %v794 = vpop.permute.xlu0 %793
        %795 = vrot.lane.b32.xlu0 %v399, 72
        %v796 = vpop.permute.xlu0 %795
        %v799 = vsel %vm410, %v794, %v796
        %v800 = vsel %vm423, %v792, 0
        %v802 = vsel %vm423, %v799, 0
        %804 = vmatprep.subr.bf16.mxu0 0
        %805 = vmatpush1.bf16.xpose.msra.mxu0 %v802
        %806 = vmatprep.subr.bf16.mxu0 0
        %807 = vmatpush1.bf16.xpose.msra.mxu0 0
        %808 = vmatprep.subr.bf16.mxu0 0
        %809 = vmatpush1.bf16.xpose.msra.mxu0 0
        %810 = vmatprep.subr.bf16.mxu0 0
        %811 = vmatpush1.bf16.xpose.msra.mxu0 0
        %812 = vmatprep.subr.bf16.mxu0 0
        %813 = vmatpush1.bf16.xpose.msra.mxu0 0
        %814 = vmatprep.subr.bf16.mxu0 0
        %815 = vmatpush1.bf16.xpose.msra.mxu0 0
        %816 = vmatprep.subr.bf16.mxu0 0
        %817 = vmatpush1.bf16.xpose.msra.mxu0 0
        %818 = vmatprep.subr.bf16.mxu0 0
        %819 = vmatpush1.bf16.xpose.msra.mxu0 0
        %820 = vmatprep.subr.bf16.mxu0 0
        %821 = vmatpush1.bf16.xpose.msra.mxu0 0
        %822 = vmatprep.subr.bf16.mxu0 0
        %823 = vmatpush1.bf16.xpose.msra.mxu0 0
        %824 = vmatprep.subr.bf16.mxu0 0
        %825 = vmatpush1.bf16.xpose.msra.mxu0 0
        %826 = vmatprep.subr.bf16.mxu0 0
        %827 = vmatpush1.bf16.xpose.msra.mxu0 0
        %828 = vmatprep.subr.bf16.mxu0 0
        %829 = vmatpush1.bf16.xpose.msra.mxu0 0
        %830 = vmatprep.subr.bf16.mxu0 0
        %831 = vmatpush1.bf16.xpose.msra.mxu0 0
        %832 = vmatprep.subr.bf16.mxu0 0
        %833 = vmatpush1.bf16.xpose.msra.mxu0 0
        %834 = vmatprep.subr.bf16.mxu0 0
        %835 = vmatpush1.bf16.xpose.msra.mxu0 0
        %836 = vmatprep.mubr.bf16.mxu0 0
        %837 = vmatmul.mubr.bf16.gmra.mrb[0].mxu0 %v800
        %v838 = vpop.f32.mrb[0].mxu0
        %v839 = vadd.f32 0.0, %v838
        %v840 = vpop.f32.mrb[0].mxu0
        %v841 = vpop.f32.mrb[0].mxu0
        %v842 = vpop.f32.mrb[0].mxu0
        %843 = vdwg.mxu0
        %v844 = vmul.f32 %v839, 0.35355338
        %v845 = vadd.f32 %v844, %v406
        %v846 = vsel %vm423, %v845, -inf
        %847 = vmax.xlane.f32.xlu0 %v846
        %v848 = vpop.xlane.xlu0 %847
        %v849 = vsub.f32 %v845, %v848
        %v850 = vmul.f32 %v849, 1.442695
        %v851 = vpow.pop %v850
        %v852 = vsel %vm423, %v851, 0.0
        %853 = vadd.xlane.f32.xlu0 %v852
        %v854 = vpop.xlane.xlu0 %853
        %v855 = vrcp.pop %v854
        %v856 = vmul.f32 %v851, %v855
        %v857 = vpack.c.bf16 %v856, %v856
        %858 = vrot.lane.b32.xlu0 %v400, 40
        %v859 = vpop.permute.xlu0 %858
        %v861 = vsel %vm423, %v857, 0
        %v864 = vsel %vm488, %v859, 0
        %866 = vmatprep.subr.bf16.mxu0 0
        %867 = vmatpush1.bf16.msra.mxu0 %v864
        %868 = vmatprep.subr.bf16.mxu0 0
        %869 = vmatpush1.bf16.msra.mxu0 0
        %870 = vmatprep.subr.bf16.mxu0 0
        %871 = vmatpush1.bf16.msra.mxu0 0
        %872 = vmatprep.subr.bf16.mxu0 0
        %873 = vmatpush1.bf16.msra.mxu0 0
        %874 = vmatprep.subr.bf16.mxu0 0
        %875 = vmatpush1.bf16.msra.mxu0 0
        %876 = vmatprep.subr.bf16.mxu0 0
        %877 = vmatpush1.bf16.msra.mxu0 0
        %878 = vmatprep.subr.bf16.mxu0 0
        %879 = vmatpush1.bf16.msra.mxu0 0
        %880 = vmatprep.subr.bf16.mxu0 0
        %881 = vmatpush1.bf16.msra.mxu0 0
        %882 = vmatprep.subr.bf16.mxu0 0
        %883 = vmatpush1.bf16.msra.mxu0 0
        %884 = vmatprep.subr.bf16.mxu0 0
        %885 = vmatpush1.bf16.msra.mxu0 0
        %886 = vmatprep.subr.bf16.mxu0 0
        %887 = vmatpush1.bf16.msra.mxu0 0
        %888 = vmatprep.subr.bf16.mxu0 0
        %889 = vmatpush1.bf16.msra.mxu0 0
        %890 = vmatprep.subr.bf16.mxu0 0
        %891 = vmatpush1.bf16.msra.mxu0 0
        %892 = vmatprep.subr.bf16.mxu0 0
        %893 = vmatpush1.bf16.msra.mxu0 0
        %894 = vmatprep.subr.bf16.mxu0 0
        %895 = vmatpush1.bf16.msra.mxu0 0
        %896 = vmatprep.subr.bf16.mxu0 0
        %897 = vmatpush1.bf16.msra.mxu0 0
        %898 = vmatprep.mubr.bf16.mxu0 0
        %899 = vmatmul.mubr.bf16.gmra.mrb[0].mxu0 %v861
        %v900 = vpop.f32.mrb[0].mxu0
        %v901 = vadd.f32 0.0, %v900
        %v902 = vpop.f32.mrb[0].mxu0
        %v903 = vpop.f32.mrb[0].mxu0
        %v904 = vpop.f32.mrb[0].mxu0
        %905 = vdwg.mxu0
        %907 = vrot.lane.b32.xlu0 %v901, 24
        %v908 = vpop.permute.xlu0 %907
        %vm910 = vcmask 261312
        %911 = vst.msk [vmem:[#allocation2] sm:$0xff] %vm910, %v908
        %v912 = vld [vmem:[#allocation2] sm:$0xff]
        %v913 = vpack.c.bf16 %v912, %v912
        %v914 = vld [vmem:[%s4] sm:$0xf]
        %v915 = vld [vmem:[%s4 + $0x4] sm:$0xf]
        %v916 = vld [vmem:[%s4 + $0x8] sm:$0xf]
        %v917 = vld [vmem:[%s4 + $0xc] sm:$0xf]
        %v922 = vunpack.c.l.b16 %v914
        %v923 = vunpack.c.l.b16 %v915
        %v924 = vunpack.c.l.b16 %v916
        %v925 = vunpack.c.l.b16 %v917
        %v926 = vpack.c.b16 %v923, %v922
        %v927 = vpack.c.b16 %v925, %v924
        %v931 = vsel %vm279, %v913, 0
        %933 = vmatprep.subr.bf16.mxu0 0
        %934 = vmatpush1.bf16.msra.mxu0 %v926
        %935 = vmatprep.subr.bf16.mxu0 0
        %936 = vmatpush1.bf16.msra.mxu0 %v927
        %937 = vmatprep.subr.bf16.mxu0 0
        %938 = vmatpush1.bf16.msra.mxu0 0
        %939 = vmatprep.subr.bf16.mxu0 0
        %940 = vmatpush1.bf16.msra.mxu0 0
        %941 = vmatprep.subr.bf16.mxu0 0
        %942 = vmatpush1.bf16.msra.mxu0 0
        %943 = vmatprep.subr.bf16.mxu0 0
        %944 = vmatpush1.bf16.msra.mxu0 0
        %945 = vmatprep.subr.bf16.mxu0 0
        %946 = vmatpush1.bf16.msra.mxu0 0
        %947 = vmatprep.subr.bf16.mxu0 0
        %948 = vmatpush1.bf16.msra.mxu0 0
        %949 = vmatprep.subr.bf16.mxu0 0
        %950 = vmatpush1.bf16.msra.mxu0 0
        %951 = vmatprep.subr.bf16.mxu0 0
        %952 = vmatpush1.bf16.msra.mxu0 0
        %953 = vmatprep.subr.bf16.mxu0 0
        %954 = vmatpush1.bf16.msra.mxu0 0
        %955 = vmatprep.subr.bf16.mxu0 0
        %956 = vmatpush1.bf16.msra.mxu0 0
        %957 = vmatprep.subr.bf16.mxu0 0
        %958 = vmatpush1.bf16.msra.mxu0 0
        %959 = vmatprep.subr.bf16.mxu0 0
        %960 = vmatpush1.bf16.msra.mxu0 0
        %961 = vmatprep.subr.bf16.mxu0 0
        %962 = vmatpush1.bf16.msra.mxu0 0
        %963 = vmatprep.subr.bf16.mxu0 0
        %964 = vmatpush1.bf16.msra.mxu0 0
        %965 = vmatprep.mubr.bf16.mxu0 0
        %966 = vmatmul.mubr.bf16.gmra.mrb[0].mxu0 %v931
        %v967 = vpop.f32.mrb[0].mxu0
        %v968 = vadd.f32 0.0, %v967
        %v969 = vpop.f32.mrb[0].mxu0
        %v970 = vpop.f32.mrb[0].mxu0
        %v971 = vpop.f32.mrb[0].mxu0
        %972 = vdwg.mxu0
        %v973 = vmul.f32 %v968, 0.5
        %v974 = vadd.f32 %v275, %v973
        %v975 = vmul.f32 %v974, %v974
        %v976 = vsel %vm279, %v975, 0.0
        %977 = vadd.xlane.f32.xlu0 %v976
        %v978 = vpop.xlane.xlu0 %977
        %v979 = vmul.f32 %v978, %v283
        %v980 = vadd.f32 %v979, 1e-06
        %v981 = vrsqrt.pop %v980
        %v982 = vmul.f32 %v974, %v981
        %v983 = vpack.c.bf16 %v982, %v982
        %v984 = vld [vmem:[%s5] sm:$0xf]
        %v985 = vld [vmem:[%s5 + $0x4] sm:$0xf]
        %v986 = vld [vmem:[%s5 + $0x8] sm:$0xf]
        %v987 = vld [vmem:[%s5 + $0xc] sm:$0xf]
        %v992 = vunpack.c.l.b16 %v984
        %v993 = vunpack.c.l.b16 %v985
        %v994 = vunpack.c.l.b16 %v986
        %v995 = vunpack.c.l.b16 %v987
        %v996 = vpack.c.b16 %v993, %v992
        %v997 = vpack.c.b16 %v995, %v994
        %v1001 = vsel %vm279, %v983, 0
        %1003 = vmatprep.subr.bf16.mxu0 0
        %1004 = vmatpush1.bf16.msra.mxu0 %v996
        %1005 = vmatprep.subr.bf16.mxu0 0
        %1006 = vmatpush1.bf16.msra.mxu0 %v997
        %1007 = vmatprep.subr.bf16.mxu0 0
        %1008 = vmatpush1.bf16.msra.mxu0 0
        %1009 = vmatprep.subr.bf16.mxu0 0
        %1010 = vmatpush1.bf16.msra.mxu0 0
        %1011 = vmatprep.subr.bf16.mxu0 0
        %1012 = vmatpush1.bf16.msra.mxu0 0
        %1013 = vmatprep.subr.bf16.mxu0 0
        %1014 = vmatpush1.bf16.msra.mxu0 0
        %1015 = vmatprep.subr.bf16.mxu0 0
        %1016 = vmatpush1.bf16.msra.mxu0 0
        %1017 = vmatprep.subr.bf16.mxu0 0
        %1018 = vmatpush1.bf16.msra.mxu0 0
        %1019 = vmatprep.subr.bf16.mxu0 0
        %1020 = vmatpush1.bf16.msra.mxu0 0
        %1021 = vmatprep.subr.bf16.mxu0 0
        %1022 = vmatpush1.bf16.msra.mxu0 0
        %1023 = vmatprep.subr.bf16.mxu0 0
        %1024 = vmatpush1.bf16.msra.mxu0 0
        %1025 = vmatprep.subr.bf16.mxu0 0
        %1026 = vmatpush1.bf16.msra.mxu0 0
        %1027 = vmatprep.subr.bf16.mxu0 0
        %1028 = vmatpush1.bf16.msra.mxu0 0
        %1029 = vmatprep.subr.bf16.mxu0 0
        %1030 = vmatpush1.bf16.msra.mxu0 0
        %1031 = vmatprep.subr.bf16.mxu0 0
        %1032 = vmatpush1.bf16.msra.mxu0 0
        %1033 = vmatprep.subr.bf16.mxu0 0
        %1034 = vmatpush1.bf16.msra.mxu0 0
        %1035 = vmatprep.mubr.bf16.mxu0 0
        %1036 = vmatmul.mubr.bf16.gmra.mrb[0].mxu0 %v1001
        %v1037 = vpop.f32.mrb[0].mxu0
        %v1038 = vadd.f32 0.0, %v1037
        %v1039 = vpop.f32.mrb[0].mxu0
        %v1040 = vpop.f32.mrb[0].mxu0
        %v1041 = vpop.f32.mrb[0].mxu0
        %1042 = vdwg.mxu0
        %v1043 = vmul.f32 %v1038, 0.5
        %v1044 = vmul.f32 %v1038, 0.70710677
        %v1045 = verf.f32.pop %v1044
        %v1046 = vadd.f32 %v1045, 1.0
        %v1047 = vmul.f32 %v1043, %v1046
        %v1048 = vpack.c.bf16 %v1047, %v1047
        %v1049 = vld [vmem:[%s6] sm:$0xf]
        %v1050 = vld [vmem:[%s6 + $0x4] sm:$0xf]
        %v1051 = vld [vmem:[%s6 + $0x8] sm:$0xf]
        %v1052 = vld [vmem:[%s6 + $0xc] sm:$0xf]
        %v1053 = vld [vmem:[%s6 + $0x10] sm:$0xf]
        %v1054 = vld [vmem:[%s6 + $0x14] sm:$0xf]
        %v1055 = vld [vmem:[%s6 + $0x18] sm:$0xf]
        %v1056 = vld [vmem:[%s6 + $0x1c] sm:$0xf]
        %v1057 = vld [vmem:[%s6 + $0x20] sm:$0xf]
        %v1058 = vld [vmem:[%s6 + $0x24] sm:$0xf]
        %v1059 = vld [vmem:[%s6 + $0x28] sm:$0xf]
        %v1060 = vld [vmem:[%s6 + $0x2c] sm:$0xf]
        %v1061 = vld [vmem:[%s6 + $0x30] sm:$0xf]
        %v1062 = vld [vmem:[%s6 + $0x34] sm:$0xf]
        %v1063 = vld [vmem:[%s6 + $0x38] sm:$0xf]
        %v1064 = vld [vmem:[%s6 + $0x3c] sm:$0xf]
        %v1081 = vunpack.c.l.b16 %v1049
        %v1082 = vunpack.c.l.b16 %v1050
        %v1083 = vunpack.c.l.b16 %v1051
        %v1084 = vunpack.c.l.b16 %v1052
        %v1085 = vunpack.c.l.b16 %v1053
        %v1086 = vunpack.c.l.b16 %v1054
        %v1087 = vunpack.c.l.b16 %v1055
        %v1088 = vunpack.c.l.b16 %v1056
        %v1089 = vunpack.c.l.b16 %v1057
        %v1090 = vunpack.c.l.b16 %v1058
        %v1091 = vunpack.c.l.b16 %v1059
        %v1092 = vunpack.c.l.b16 %v1060
        %v1093 = vunpack.c.l.b16 %v1061
        %v1094 = vunpack.c.l.b16 %v1062
        %v1095 = vunpack.c.l.b16 %v1063
        %v1096 = vunpack.c.l.b16 %v1064
        %v1097 = vpack.c.b16 %v1082, %v1081
        %v1098 = vpack.c.b16 %v1084, %v1083
        %v1099 = vpack.c.b16 %v1086, %v1085
        %v1100 = vpack.c.b16 %v1088, %v1087
        %v1101 = vpack.c.b16 %v1090, %v1089
        %v1102 = vpack.c.b16 %v1092, %v1091
        %v1103 = vpack.c.b16 %v1094, %v1093
        %v1104 = vpack.c.b16 %v1096, %v1095
        %1113 = vmatprep.subr.bf16.mxu0 0
        %1114 = vmatpush1.bf16.msra.mxu0 %v1097
        %1115 = vmatprep.subr.bf16.mxu0 0
        %1116 = vmatpush1.bf16.msra.mxu0 %v1098
        %1117 = vmatprep.subr.bf16.mxu0 0
        %1118 = vmatpush1.bf16.msra.mxu0 %v1099
        %1119 = vmatprep.subr.bf16.mxu0 0
        %1120 = vmatpush1.bf16.msra.mxu0 %v1100
        %1121 = vmatprep.subr.bf16.mxu0 0
        %1122 = vmatpush1.bf16.msra.mxu0 %v1101
        %1123 = vmatprep.subr.bf16.mxu0 0
        %1124 = vmatpush1.bf16.msra.mxu0 %v1102
        %1125 = vmatprep.subr.bf16.mxu0 0
        %1126 = vmatpush1.bf16.msra.mxu0 %v1103
        %1127 = vmatprep.subr.bf16.mxu0 0
        %1128 = vmatpush1.bf16.msra.mxu0 %v1104
        %1129 = vmatprep.subr.bf16.mxu0 0
        %1130 = vmatpush1.bf16.msra.mxu0 0
        %1131 = vmatprep.subr.bf16.mxu0 0
        %1132 = vmatpush1.bf16.msra.mxu0 0
        %1133 = vmatprep.subr.bf16.mxu0 0
        %1134 = vmatpush1.bf16.msra.mxu0 0
        %1135 = vmatprep.subr.bf16.mxu0 0
        %1136 = vmatpush1.bf16.msra.mxu0 0
        %1137 = vmatprep.subr.bf16.mxu0 0
        %1138 = vmatpush1.bf16.msra.mxu0 0
        %1139 = vmatprep.subr.bf16.mxu0 0
        %1140 = vmatpush1.bf16.msra.mxu0 0
        %1141 = vmatprep.subr.bf16.mxu0 0
        %1142 = vmatpush1.bf16.msra.mxu0 0
        %1143 = vmatprep.subr.bf16.mxu0 0
        %1144 = vmatpush1.bf16.msra.mxu0 0
        %1145 = vmatprep.mubr.bf16.mxu0 0
        %1146 = vmatmul.mubr.bf16.gmra.mrb[0].mxu0 %v1048
        %v1147 = vpop.f32.mrb[0].mxu0
        %v1148 = vadd.f32 0.0, %v1147
        %v1149 = vpop.f32.mrb[0].mxu0
        %v1150 = vpop.f32.mrb[0].mxu0
        %v1151 = vpop.f32.mrb[0].mxu0
        %1152 = vdwg.mxu0
        %v1153 = vadd.f32 %v974, %v1148
        %1154 = vst.msk [vmem:[%s269] sm:$0xff] %vm279, %v1153
        %s1155 = sand.u32 %s181, 1
        %s1156 = scalar_lea.sflag [#allocation4], %s1155
        %s1157 = sand.u32 %s181, 1
        %s1158 = smul.addr %s1157, 8
        %s1159 = scalar_lea.vmem [#allocation3], %s1158
        // Predicated region
        $region49: #{tpu_custom_call.1} parent=47 // pred_check
          %p1160 = pneg %p191
        $region50: #{tpu_custom_call.1} parent=47 // pred_check_branch
          %1162 = sbr.rel (%p1160) target = $region52
        $region51: #{tpu_custom_call.1} parent=47 // pred_region
          %s1164 = ssub.s32 128, 128
          %1165 = vsyncadd %s1156, %s1164
          %s1166 = smul.addr %s21, 128
          %s1167 = scalar_lea.hbm %s7, %s1166
          %s1169 = sshll.u32 %s1159, 4
          %s1170 = int_to_ptr.vmem [resolvable:$true] %s1169
          %1172 = dma.vmem_to_hbm [thread:$0]  %s1170, 128, %s1167, %s1156
        $region52: #{tpu_custom_call.1} parent=47 // pred_fallthru
          _
      $region48: #{tpu_custom_call.1} parent=5 // pred_fallthru
        _
      %p1173 = scmp.le.s32.totalorder 2, %s16
      // Predicated region
      $region53: #{tpu_custom_call.1} parent=5 // pred_check
        %p1174 = pneg %p1173
      $region54: #{tpu_custom_call.1} parent=5 // pred_check_branch
        %1176 = sbr.rel (%p1174) target = $region56
      $region55: #{tpu_custom_call.1} parent=5 // pred_region
        %s1177 = ssub.s32 %s16, 2
        // Predicated region
        $region57: #{tpu_custom_call.1} parent=55 // pred_check
          %p1178 = pneg %p197
        $region58: #{tpu_custom_call.1} parent=55 // pred_check_branch
          %1180 = sbr.rel (%p1178) target = $region60
        $region59: #{tpu_custom_call.1} parent=55 // pred_region
          %s1181 = sand.u32 %s182, 1
          %s1182 = scalar_lea.sflag [#allocation4], %s1181
          %s1183 = sand.u32 %s182, 1
          %s1184 = smul.addr %s1183, 8
          %s1185 = scalar_lea.vmem [#allocation3], %s1184
          %1186 = dma.done %s1182, 128
        $region60: #{tpu_custom_call.1} parent=55 // pred_fallthru
          _
      $region56: #{tpu_custom_call.1} parent=5 // pred_fallthru
        _
    $region6: #{tpu_custom_call.1} parent=1 // loop_footer
      %s20 = sadd.s32 1, %s16
    $region7: #{tpu_custom_call.1} parent=1 // loop_footer_branch
      %15 = sbr.rel target = $region3
    $region8: #{tpu_custom_call.1} parent=1 // loop_exit
      _
    %1187 = vsyncpa [#allocation4], 1
    %s1188 = scalar_lea.sflag [#allocation4], 1
    %1189 = vsyncpa %s1188, 1

</llo_original>
